<compile_context>
chip_gen: v5e
topology: v5e:2x2
jax: 0.10.0
libtpu: 0.0.40
codegen_flags: <defaults>
</compile_context>

<pallas_src>
import functools

import numpy as np
import jax
import jax.numpy as jnp
from jax import lax
from jax.experimental import pallas as pl
from jax.experimental.pallas import tpu as pltpu


def _round_up(x, m):
    return (x + m - 1) // m * m


def _pick_tile(total, target):
    """Largest multiple-of-128 tile <= target dividing round_up(total, 128)."""
    total_pad = _round_up(total, 128)
    best = 128
    for t in range(128, total_pad + 1, 128):
        if total_pad % t == 0 and t <= target:
            best = t
    return best, total_pad


def _default_vmem_limit_bytes():
    # 96 MiB-ish on 128 MiB parts (v5e/v6e), ~48 MiB on v7x's 64 MiB.
    try:
        cap = int(pltpu.get_tpu_info().vmem_capacity_bytes)
    except Exception:
        cap = 64 * 1024 * 1024
    return int(min(cap * 3 // 4, 100 * 1024 * 1024))


def _warp_kernel(qlo_ref, qhi_ref, base_ref, flow_ref, src_ref, out_ref, *,
                 h_src, w_src, h_flow, w_flow, matmul_dtype):
    bi = pl.program_id(0)
    pi = pl.program_id(1)
    n_p = pl.num_programs(1)

    c_dim, tp = out_ref.shape
    tq = src_ref.shape[2]

    # ---- per-output-tile coordinate / weight math (computed ONCE per grid
    # step; the Q reduction loop below only reuses the results) ----
    row_c = base_ref[0:1, :]                 # (1, tp) identity row index
    col_c = base_ref[1:2, :]                 # (1, tp) identity col index
    fl = flow_ref[...].astype(jnp.float32)   # (2, tp)
    new_y = row_c + fl[0:1, :]
    new_x = col_c + fl[1:2, :]
    # Module normalizes by (dim - 1); grid_sample unnormalizes with the
    # PyTorch default align_corners=False.
    gy = 2.0 * (new_y / float(h_flow - 1) - 0.5)
    gx = 2.0 * (new_x / float(w_flow - 1) - 0.5)
    y_pix = ((gy + 1.0) * float(h_src) - 1.0) * 0.5
    x_pix = ((gx + 1.0) * float(w_src) - 1.0) * 0.5

    y0f = jnp.floor(y_pix)
    x0f = jnp.floor(x_pix)
    wy1 = y_pix - y0f
    wy0 = 1.0 - wy1
    wx1 = x_pix - x0f
    wx0 = 1.0 - wx1
    y0 = y0f.astype(jnp.int32)
    x0 = x0f.astype(jnp.int32)
    y1 = y0 + 1
    x1 = x0 + 1

    vy0 = jnp.logical_and(y0 >= 0, y0 < h_src)
    vy1 = jnp.logical_and(y1 >= 0, y1 < h_src)
    vx0 = jnp.logical_and(x0 >= 0, x0 < w_src)
    vx1 = jnp.logical_and(x1 >= 0, x1 < w_src)

    # padding_mode='zeros': mask the WEIGHT (not the index) so an OOB tap whose
    # linear index aliases a valid pixel contributes exactly 0.  Weights are
    # cast to matmul_dtype here so the (TQ,TP) select chain emits that dtype
    # directly (no full-size cast pass afterwards).
    w00 = jnp.where(jnp.logical_and(vy0, vx0), wy0 * wx0, 0.0).astype(matmul_dtype)
    w01 = jnp.where(jnp.logical_and(vy0, vx1), wy0 * wx1, 0.0).astype(matmul_dtype)
    w10 = jnp.where(jnp.logical_and(vy1, vx0), wy1 * wx0, 0.0).astype(matmul_dtype)
    w11 = jnp.where(jnp.logical_and(vy1, vx1), wy1 * wx1, 0.0).astype(matmul_dtype)
    i00 = y0 * w_src + x0                    # (1, tp) flat index of top-left tap
    zero = jnp.zeros((), matmul_dtype)

    # ---- reduction over only the contributing source chunks ----
    tidx = bi * n_p + pi
    qlo = qlo_ref[tidx]
    qhi = qhi_ref[tidx]

    def q_body(qb, acc):
        # Fold the chunk offset into the (1, TP) index; the raw iota stays
        # loop-invariant (cheap to hoist / rematerialize).
        d0 = i00 - qb * tq
        q_iota = lax.broadcasted_iota(jnp.int32, (tq, tp), 0)
        d = q_iota - d0                      # (tq, tp)
        # The 4 bilinear taps sit at deltas {0, 1, w_src, w_src+1} from the
        # top-left index (w_src >= 2 -> distinct).  M is built directly in the
        # canonical (K, N) = (TQ, TP) orientation for the MXU.
        m = jnp.where(d == 0, w00,
            jnp.where(d == 1, w01,
            jnp.where(d == w_src, w10,
            jnp.where(d == w_src + 1, w11, zero))))
        src_chunk = src_ref[qb]              # (C, TQ), already matmul_dtype
        return acc + lax.dot_general(
            src_chunk, m, (((1,), (0,)), ((), ())),
            preferred_element_type=jnp.float32)

    acc0 = jnp.zeros((c_dim, tp), jnp.float32)
    acc = lax.fori_loop(qlo, qhi, q_body, acc0)
    out_ref[...] = acc.astype(out_ref.dtype)


def spatial_transformer_2d(src, flow, *, tile_out_pixels=None, src_chunk_pixels=None,
                           matmul_dtype=jnp.float32,
                           target_out_pixels=512, target_src_chunk=512,
                           vmem_limit_bytes=None):
    b, c, h_s, w_s = src.shape
    b_f, two, h_f, w_f = flow.shape
    assert b == b_f and two == 2
    # The module divides by (dim - 1); dims of 1 would divide by zero (same
    # failure mode as the PyTorch reference) and the fused delta placement
    # needs w_s >= 2 so the 4 corner offsets are distinct.
    assert h_f >= 2 and w_f >= 2, "flow spatial dims must be >= 2"
    assert h_s >= 2 and w_s >= 2, "src spatial dims must be >= 2"

    hw_in = h_s * w_s
    hw_out = h_f * w_f

    if tile_out_pixels is None:
        tp, hw_out_pad = _pick_tile(hw_out, target_out_pixels)
    else:
        assert tile_out_pixels % 128 == 0
        tp = tile_out_pixels
        hw_out_pad = _round_up(hw_out, tp)
    if src_chunk_pixels is None:
        tq, hw_in_pad = _pick_tile(hw_in, target_src_chunk)
    else:
        assert src_chunk_pixels % 128 == 0
        tq = src_chunk_pixels
        hw_in_pad = _round_up(hw_in, tq)
    n_p = hw_out_pad // tp
    n_q = hw_in_pad // tq

    if vmem_limit_bytes is None:
        vmem_limit_bytes = _default_vmem_limit_bytes()

    msize = jnp.dtype(matmul_dtype).itemsize
    resident = 2 * _round_up(c, 8) * hw_in_pad * msize  # double-buffered resident src
    # TODO(synk): add a tiled-source (extra reduction grid axis) fallback when
    # the whole image does not fit; the resident path eliminates the n_p-fold
    # redundant source DMA and all wasted grid steps.
    assert resident <= vmem_limit_bytes // 2, (
        f"source image too large to keep VMEM-resident ({resident} bytes)")

    # Lane-dense, zero-padded flat layouts (unmasked vld/vst in the kernel).
    # Source is cast to matmul_dtype ONCE here and laid out as (B, n_q, C, TQ)
    # so the in-kernel chunk select is a leading-dim whole-tile index.
    src_flat = jnp.pad(src.reshape(b, c, hw_in).astype(matmul_dtype),
                       ((0, 0), (0, 0), (0, hw_in_pad - hw_in)))
    src_resh = jnp.transpose(src_flat.reshape(b, c, n_q, tq), (0, 2, 1, 3))
    flow_flat = jnp.pad(flow.reshape(b, 2, hw_out).astype(jnp.float32),
                        ((0, 0), (0, 0), (0, hw_out_pad - hw_out)))

    # Identity grid (row, col) per flat output pixel (padded tail is sliced off).
    pix = np.arange(hw_out_pad)
    base = jnp.asarray(np.stack([(pix // w_f).astype(np.float32),
                                 (pix % w_f).astype(np.float32)]))   # (2, hw_out_pad)

    # Per-(batch, P-tile) [qlo, qhi) bounds of the contributing source chunks,
    # scalar-prefetched so the in-kernel loop visits only those chunks.
    yy = jnp.arange(h_f, dtype=jnp.float32).reshape(1, h_f, 1)
    xx = jnp.arange(w_f, dtype=jnp.float32).reshape(1, 1, w_f)
    fy = flow[:, 0].astype(jnp.float32)
    fx = flow[:, 1].astype(jnp.float32)
    gy = 2.0 * ((yy + fy) / float(h_f - 1) - 0.5)
    gx = 2.0 * ((xx + fx) / float(w_f - 1) - 0.5)
    y0 = jnp.floor(((gy + 1.0) * float(h_s) - 1.0) * 0.5).astype(jnp.int32)
    x0 = jnp.floor(((gx + 1.0) * float(w_s) - 1.0) * 0.5).astype(jnp.int32)
    i00 = (y0 * w_s + x0).reshape(b, hw_out)
    pad_out = hw_out_pad - hw_out
    big = np.int32(2 ** 30)
    i00_lo = jnp.pad(i00, ((0, 0), (0, pad_out)), constant_values=big)
    i00_hi = jnp.pad(i00, ((0, 0), (0, pad_out)), constant_values=-big)
    slack = 8  # guards against 1-ulp wrapper/kernel float-op-order divergences
    lo = jnp.clip(jnp.min(i00_lo.reshape(b, n_p, tp), axis=-1) - slack, 0, hw_in_pad)
    hi = jnp.clip(jnp.max(i00_hi.reshape(b, n_p, tp), axis=-1) + (w_s + 2) + slack,
                  0, hw_in_pad)
    qlo = (lo // tq).astype(jnp.int32).reshape(b * n_p)
    qhi = ((hi + tq - 1) // tq).astype(jnp.int32).reshape(b * n_p)
    qhi = jnp.maximum(qhi, qlo)

    kernel = functools.partial(_warp_kernel, h_src=h_s, w_src=w_s,
                               h_flow=h_f, w_flow=w_f, matmul_dtype=matmul_dtype)

    out_flat = pl.pallas_call(
        kernel,
        out_shape=jax.ShapeDtypeStruct((b, c, hw_out_pad), src.dtype),
        grid_spec=pltpu.PrefetchScalarGridSpec(
            num_scalar_prefetch=2,
            grid=(b, n_p),
            in_specs=[
                pl.BlockSpec((2, tp), lambda bi, pi, lo_r, hi_r: (0, pi)),
                pl.BlockSpec((None, 2, tp), lambda bi, pi, lo_r, hi_r: (bi, 0, pi)),
                pl.BlockSpec((None, n_q, c, tq), lambda bi, pi, lo_r, hi_r: (bi, 0, 0, 0)),
            ],
            out_specs=pl.BlockSpec((None, c, tp), lambda bi, pi, lo_r, hi_r: (bi, 0, pi)),
        ),
        compiler_params=pltpu.CompilerParams(
            dimension_semantics=("parallel", "parallel"),
            vmem_limit_bytes=vmem_limit_bytes),
    )(qlo, qhi, base, flow_flat, src_resh)

    return out_flat[:, :, :hw_out].reshape(b, c, h_f, w_f)


def _reference(src, flow):
    """Pure-JAX reference with identical semantics (for correctness check)."""
    b, c, h_s, w_s = src.shape
    _, _, h_f, w_f = flow.shape
    yb, xb = jnp.meshgrid(jnp.arange(h_f, dtype=jnp.float32),
                          jnp.arange(w_f, dtype=jnp.float32), indexing="ij")
    new_y = yb[None] + flow[:, 0].astype(jnp.float32)
    new_x = xb[None] + flow[:, 1].astype(jnp.float32)
    gy = 2.0 * (new_y / (h_f - 1) - 0.5)
    gx = 2.0 * (new_x / (w_f - 1) - 0.5)
    y_pix = ((gy + 1.0) * h_s - 1.0) * 0.5
    x_pix = ((gx + 1.0) * w_s - 1.0) * 0.5
    y0 = jnp.floor(y_pix)
    x0 = jnp.floor(x_pix)
    wy1 = y_pix - y0
    wy0 = 1.0 - wy1
    wx1 = x_pix - x0
    wx0 = 1.0 - wx1
    y0i = y0.astype(jnp.int32)
    x0i = x0.astype(jnp.int32)

    def sample_one(s, yc, xc):
        return s[:, yc, xc]  # (C, H_f, W_f)

    out = jnp.zeros((b, c, h_f, w_f), jnp.float32)
    for yy, xx, ww in [(y0i, x0i, wy0 * wx0), (y0i, x0i + 1, wy0 * wx1),
                       (y0i + 1, x0i, wy1 * wx0), (y0i + 1, x0i + 1, wy1 * wx1)]:
        valid = ((yy >= 0) & (yy < h_s) & (xx >= 0) & (xx < w_s))
        yc = jnp.clip(yy, 0, h_s - 1)
        xc = jnp.clip(xx, 0, w_s - 1)
        vals = jax.vmap(sample_one)(src.astype(jnp.float32), yc, xc)
        out = out + vals * (ww * valid.astype(jnp.float32))[:, None, :, :]
    return out.astype(src.dtype)


if __name__ == "__main__":
    key = jax.random.PRNGKey(0)
    k1, k2, k3, k4 = jax.random.split(key, 4)

    # Primary case: B=2, C=4, 16x16.
    B, C, H, W = 2, 4, 16, 16
    src = jax.random.normal(k1, (B, C, H, W), dtype=jnp.float32)
    # displacements of a few pixels (some samples go out of bounds -> zeros pad)
    flow = 3.0 * jax.random.normal(k2, (B, 2, H, W), dtype=jnp.float32)
    ref = _reference(src, flow)

    out = spatial_transformer_2d(src, flow)
    out = jax.block_until_ready(out)
    assert out.shape == (B, C, H, W)
    assert jnp.allclose(out, ref, atol=1e-4, rtol=1e-4), "default-path mismatch"

    # Forced small tiles: exercises multiple output tiles, the in-kernel Q
    # reduction over several source chunks and the scalar-prefetched [qlo,qhi).
    out_t = spatial_transformer_2d(src, flow, tile_out_pixels=128, src_chunk_pixels=128)
    out_t = jax.block_until_ready(out_t)
    assert jnp.allclose(out_t, ref, atol=1e-4, rtol=1e-4), "tiled-path mismatch"

    # Non-lane-aligned spatial dims + src/flow resolution mismatch: exercises
    # HW_in / HW_out zero-padding and separate (h_src,w_src)/(h_flow,w_flow).
    src2 = jax.random.normal(k3, (1, 3, 10, 14), dtype=jnp.float32)
    flow2 = 2.0 * jax.random.normal(k4, (1, 2, 12, 20), dtype=jnp.float32)
    ref2 = _reference(src2, flow2)
    out2 = spatial_transformer_2d(src2, flow2, tile_out_pixels=128, src_chunk_pixels=128)
    out2 = jax.block_until_ready(out2)
    assert out2.shape == (1, 3, 12, 20)
    assert jnp.allclose(out2, ref2, atol=1e-4, rtol=1e-4), "padded-path mismatch"

    print("KERNEL_OK")
</pallas_src>

<mosaic_0001>
module attributes {stable_mosaic.version = 11 : i64} {
  func.func @_warp_kernel(%arg0: i32, %arg1: i32, %arg2: memref<2xi32, #tpu.memory_space<smem>>, %arg3: memref<2xi32, #tpu.memory_space<smem>>, %arg4: memref<2x256xf32, #tpu.memory_space<vmem>>, %arg5: memref<1x2x256xf32, #tpu.memory_space<vmem>>, %arg6: memref<1x1x4x256xf32, #tpu.memory_space<vmem>>, %arg7: memref<1x4x256xf32, #tpu.memory_space<vmem>>) attributes {dimension_semantics = [#tpu.dimension_semantics<parallel>, #tpu.dimension_semantics<parallel>], iteration_bounds = array<i64: 2, 1>, scalar_prefetch = 2 : i64, scratch_operands = 0 : i64, tpu.core_type = #tpu.core_type<tc>, window_params = [{transform_indices = @transform_0, window_bounds = array<i64: 2, 256>}, {transform_indices = @transform_1, window_bounds = array<i64: 1, 2, 256>}, {transform_indices = @transform_2, window_bounds = array<i64: 1, 1, 4, 256>}, {transform_indices = @transform_3, window_bounds = array<i64: 1, 4, 256>}]} {
    %c0 = arith.constant 0 : index
    %c0_0 = arith.constant 0 : index
    %0 = vector.load %arg4[%c0, %c0_0] : memref<2x256xf32, #tpu.memory_space<vmem>>, vector<1x256xf32>
    %c1 = arith.constant 1 : index
    %c0_1 = arith.constant 0 : index
    %1 = vector.load %arg4[%c1, %c0_1] : memref<2x256xf32, #tpu.memory_space<vmem>>, vector<1x256xf32>
    %c0_2 = arith.constant 0 : index
    %c0_3 = arith.constant 0 : index
    %c0_4 = arith.constant 0 : index
    %2 = vector.load %arg5[%c0_2, %c0_3, %c0_4] : memref<1x2x256xf32, #tpu.memory_space<vmem>>, vector<1x2x256xf32>
    %3 = vector.shape_cast %2 : vector<1x2x256xf32> to vector<2x256xf32>
    %4 = vector.extract_strided_slice %3 {offsets = [0, 0], sizes = [1, 256], strides = [1, 1]} : vector<2x256xf32> to vector<1x256xf32>
    %5 = arith.addf %0, %4 : vector<1x256xf32>
    %6 = vector.extract_strided_slice %3 {offsets = [1, 0], sizes = [1, 256], strides = [1, 1]} : vector<2x256xf32> to vector<1x256xf32>
    %7 = arith.addf %1, %6 : vector<1x256xf32>
    %cst = arith.constant 1.500000e+01 : f32
    %8 = vector.broadcast %cst : f32 to vector<1x256xf32>
    %9 = arith.divf %5, %8 : vector<1x256xf32>
    %cst_5 = arith.constant 5.000000e-01 : f32
    %10 = vector.broadcast %cst_5 : f32 to vector<1x256xf32>
    %11 = arith.subf %9, %10 : vector<1x256xf32>
    %cst_6 = arith.constant 2.000000e+00 : f32
    %12 = vector.broadcast %cst_6 : f32 to vector<1x256xf32>
    %13 = arith.mulf %12, %11 : vector<1x256xf32>
    %cst_7 = arith.constant 1.500000e+01 : f32
    %14 = vector.broadcast %cst_7 : f32 to vector<1x256xf32>
    %15 = arith.divf %7, %14 : vector<1x256xf32>
    %cst_8 = arith.constant 5.000000e-01 : f32
    %16 = vector.broadcast %cst_8 : f32 to vector<1x256xf32>
    %17 = arith.subf %15, %16 : vector<1x256xf32>
    %cst_9 = arith.constant 2.000000e+00 : f32
    %18 = vector.broadcast %cst_9 : f32 to vector<1x256xf32>
    %19 = arith.mulf %18, %17 : vector<1x256xf32>
    %cst_10 = arith.constant 1.000000e+00 : f32
    %20 = vector.broadcast %cst_10 : f32 to vector<1x256xf32>
    %21 = arith.addf %13, %20 : vector<1x256xf32>
    %cst_11 = arith.constant 1.600000e+01 : f32
    %22 = vector.broadcast %cst_11 : f32 to vector<1x256xf32>
    %23 = arith.mulf %21, %22 : vector<1x256xf32>
    %cst_12 = arith.constant 1.000000e+00 : f32
    %24 = vector.broadcast %cst_12 : f32 to vector<1x256xf32>
    %25 = arith.subf %23, %24 : vector<1x256xf32>
    %cst_13 = arith.constant 5.000000e-01 : f32
    %26 = vector.broadcast %cst_13 : f32 to vector<1x256xf32>
    %27 = arith.mulf %25, %26 : vector<1x256xf32>
    %cst_14 = arith.constant 1.000000e+00 : f32
    %28 = vector.broadcast %cst_14 : f32 to vector<1x256xf32>
    %29 = arith.addf %19, %28 : vector<1x256xf32>
    %cst_15 = arith.constant 1.600000e+01 : f32
    %30 = vector.broadcast %cst_15 : f32 to vector<1x256xf32>
    %31 = arith.mulf %29, %30 : vector<1x256xf32>
    %cst_16 = arith.constant 1.000000e+00 : f32
    %32 = vector.broadcast %cst_16 : f32 to vector<1x256xf32>
    %33 = arith.subf %31, %32 : vector<1x256xf32>
    %cst_17 = arith.constant 5.000000e-01 : f32
    %34 = vector.broadcast %cst_17 : f32 to vector<1x256xf32>
    %35 = arith.mulf %33, %34 : vector<1x256xf32>
    %36 = math.floor %27 : vector<1x256xf32>
    %37 = math.floor %35 : vector<1x256xf32>
    %38 = arith.subf %27, %36 : vector<1x256xf32>
    %cst_18 = arith.constant 1.000000e+00 : f32
    %39 = vector.broadcast %cst_18 : f32 to vector<1x256xf32>
    %40 = arith.subf %39, %38 : vector<1x256xf32>
    %41 = arith.subf %35, %37 : vector<1x256xf32>
    %cst_19 = arith.constant 1.000000e+00 : f32
    %42 = vector.broadcast %cst_19 : f32 to vector<1x256xf32>
    %43 = arith.subf %42, %41 : vector<1x256xf32>
    %44 = arith.fptosi %36 : vector<1x256xf32> to vector<1x256xi32>
    %45 = arith.fptosi %37 : vector<1x256xf32> to vector<1x256xi32>
    %c1_i32 = arith.constant 1 : i32
    %46 = vector.broadcast %c1_i32 : i32 to vector<1x256xi32>
    %47 = arith.addi %44, %46 : vector<1x256xi32>
    %c1_i32_20 = arith.constant 1 : i32
    %48 = vector.broadcast %c1_i32_20 : i32 to vector<1x256xi32>
    %49 = arith.addi %45, %48 : vector<1x256xi32>
    %c0_i32 = arith.constant 0 : i32
    %50 = vector.broadcast %c0_i32 : i32 to vector<1x256xi32>
    %51 = arith.cmpi sge, %44, %50 : vector<1x256xi32>
    %c16_i32 = arith.constant 16 : i32
    %52 = vector.broadcast %c16_i32 : i32 to vector<1x256xi32>
    %53 = arith.cmpi slt, %44, %52 : vector<1x256xi32>
    %54 = arith.andi %51, %53 : vector<1x256xi1>
    %c0_i32_21 = arith.constant 0 : i32
    %55 = vector.broadcast %c0_i32_21 : i32 to vector<1x256xi32>
    %56 = arith.cmpi sge, %47, %55 : vector<1x256xi32>
    %c16_i32_22 = arith.constant 16 : i32
    %57 = vector.broadcast %c16_i32_22 : i32 to vector<1x256xi32>
    %58 = arith.cmpi slt, %47, %57 : vector<1x256xi32>
    %59 = arith.andi %56, %58 : vector<1x256xi1>
    %c0_i32_23 = arith.constant 0 : i32
    %60 = vector.broadcast %c0_i32_23 : i32 to vector<1x256xi32>
    %61 = arith.cmpi sge, %45, %60 : vector<1x256xi32>
    %c16_i32_24 = arith.constant 16 : i32
    %62 = vector.broadcast %c16_i32_24 : i32 to vector<1x256xi32>
    %63 = arith.cmpi slt, %45, %62 : vector<1x256xi32>
    %64 = arith.andi %61, %63 : vector<1x256xi1>
    %c0_i32_25 = arith.constant 0 : i32
    %65 = vector.broadcast %c0_i32_25 : i32 to vector<1x256xi32>
    %66 = arith.cmpi sge, %49, %65 : vector<1x256xi32>
    %c16_i32_26 = arith.constant 16 : i32
    %67 = vector.broadcast %c16_i32_26 : i32 to vector<1x256xi32>
    %68 = arith.cmpi slt, %49, %67 : vector<1x256xi32>
    %69 = arith.andi %66, %68 : vector<1x256xi1>
    %70 = arith.andi %54, %64 : vector<1x256xi1>
    %71 = arith.mulf %40, %43 : vector<1x256xf32>
    %cst_27 = arith.constant 0.000000e+00 : f32
    %72 = vector.broadcast %cst_27 : f32 to vector<1x256xf32>
    %73 = arith.select %70, %71, %72 : vector<1x256xi1>, vector<1x256xf32>
    %74 = arith.andi %54, %69 : vector<1x256xi1>
    %75 = arith.mulf %40, %41 : vector<1x256xf32>
    %cst_28 = arith.constant 0.000000e+00 : f32
    %76 = vector.broadcast %cst_28 : f32 to vector<1x256xf32>
    %77 = arith.select %74, %75, %76 : vector<1x256xi1>, vector<1x256xf32>
    %78 = arith.andi %59, %64 : vector<1x256xi1>
    %79 = arith.mulf %38, %43 : vector<1x256xf32>
    %cst_29 = arith.constant 0.000000e+00 : f32
    %80 = vector.broadcast %cst_29 : f32 to vector<1x256xf32>
    %81 = arith.select %78, %79, %80 : vector<1x256xi1>, vector<1x256xf32>
    %82 = arith.andi %59, %69 : vector<1x256xi1>
    %83 = arith.mulf %38, %41 : vector<1x256xf32>
    %cst_30 = arith.constant 0.000000e+00 : f32
    %84 = vector.broadcast %cst_30 : f32 to vector<1x256xf32>
    %85 = arith.select %82, %83, %84 : vector<1x256xi1>, vector<1x256xf32>
    %c16_i32_31 = arith.constant 16 : i32
    %86 = vector.broadcast %c16_i32_31 : i32 to vector<1x256xi32>
    %87 = arith.muli %44, %86 : vector<1x256xi32>
    %88 = arith.addi %87, %45 : vector<1x256xi32>
    %c1_i32_32 = arith.constant 1 : i32
    %89 = arith.muli %arg0, %c1_i32_32 : i32
    %90 = arith.addi %89, %arg1 : i32
    %91 = arith.index_cast %90 : i32 to index
    %92 = memref.load %arg2[%91] : memref<2xi32, #tpu.memory_space<smem>>
    %93 = arith.index_cast %90 : i32 to index
    %94 = memref.load %arg3[%93] : memref<2xi32, #tpu.memory_space<smem>>
    %cst_33 = arith.constant 0.000000e+00 : f32
    %95 = vector.broadcast %cst_33 : f32 to vector<4x256xf32>
    %cst_34 = arith.constant 0.000000e+00 : f32
    %96 = arith.subi %94, %92 : i32
    %97 = arith.addi %92, %96 : i32
    %c1_i32_35 = arith.constant 1 : i32
    %98 = scf.for %arg8 = %92 to %97 step %c1_i32_35 iter_args(%arg9 = %95) -> (vector<4x256xf32>)  : i32 {
      %c256_i32 = arith.constant 256 : i32
      %102 = arith.muli %arg8, %c256_i32 : i32
      %103 = vector.broadcast %102 : i32 to vector<1x256xi32>
      %104 = arith.subi %88, %103 : vector<1x256xi32>
      %105 = tpu.iota {dimensions = array<i32: 0>} : vector<256x256xi32>
      %106 = vector.broadcast %104 : vector<1x256xi32> to vector<256x256xi32>
      %107 = arith.subi %105, %106 : vector<256x256xi32>
      %c0_i32_39 = arith.constant 0 : i32
      %108 = vector.broadcast %c0_i32_39 : i32 to vector<256x256xi32>
      %109 = arith.cmpi eq, %107, %108 : vector<256x256xi32>
      %c1_i32_40 = arith.constant 1 : i32
      %110 = vector.broadcast %c1_i32_40 : i32 to vector<256x256xi32>
      %111 = arith.cmpi eq, %107, %110 : vector<256x256xi32>
      %c16_i32_41 = arith.constant 16 : i32
      %112 = vector.broadcast %c16_i32_41 : i32 to vector<256x256xi32>
      %113 = arith.cmpi eq, %107, %112 : vector<256x256xi32>
      %c17_i32 = arith.constant 17 : i32
      %114 = vector.broadcast %c17_i32 : i32 to vector<256x256xi32>
      %115 = arith.cmpi eq, %107, %114 : vector<256x256xi32>
      %116 = vector.shape_cast %85 : vector<1x256xf32> to vector<1x256xf32>
      %117 = vector.broadcast %116 : vector<1x256xf32> to vector<256x256xf32>
      %118 = vector.broadcast %cst_34 : f32 to vector<256x256xf32>
      %119 = arith.select %115, %117, %118 : vector<256x256xi1>, vector<256x256xf32>
      %120 = vector.shape_cast %81 : vector<1x256xf32> to vector<1x256xf32>
      %121 = vector.broadcast %120 : vector<1x256xf32> to vector<256x256xf32>
      %122 = arith.select %113, %121, %119 : vector<256x256xi1>, vector<256x256xf32>
      %123 = vector.shape_cast %77 : vector<1x256xf32> to vector<1x256xf32>
      %124 = vector.broadcast %123 : vector<1x256xf32> to vector<256x256xf32>
      %125 = arith.select %111, %124, %122 : vector<256x256xi1>, vector<256x256xf32>
      %126 = vector.shape_cast %73 : vector<1x256xf32> to vector<1x256xf32>
      %127 = vector.broadcast %126 : vector<1x256xf32> to vector<256x256xf32>
      %128 = arith.select %109, %127, %125 : vector<256x256xi1>, vector<256x256xf32>
      %c0_42 = arith.constant 0 : index
      %129 = arith.index_cast %arg8 : i32 to index
      %c0_43 = arith.constant 0 : index
      %c0_44 = arith.constant 0 : index
      %130 = vector.load %arg6[%c0_42, %129, %c0_43, %c0_44] : memref<1x1x4x256xf32, #tpu.memory_space<vmem>>, vector<1x1x4x256xf32>
      %131 = vector.shape_cast %130 : vector<1x1x4x256xf32> to vector<4x256xf32>
      %cst_45 = arith.constant dense<0.000000e+00> : vector<4x256xf32>
      %132 = tpu.matmul %131, %128, %cst_45 {dimension_numbers = #tpu.dot_dimension_numbers<[1], [0], [0], [1], [0, 0, 1, 1], [], []>} : vector<4x256xf32>, vector<256x256xf32>, vector<4x256xf32> -> vector<4x256xf32>
      %133 = arith.addf %arg9, %132 : vector<4x256xf32>
      scf.yield %133 : vector<4x256xf32>
    }
    %c0_36 = arith.constant 0 : index
    %c0_37 = arith.constant 0 : index
    %c0_38 = arith.constant 0 : index
    %99 = vector.load %arg7[%c0_36, %c0_37, %c0_38] : memref<1x4x256xf32, #tpu.memory_space<vmem>>, vector<1x4x256xf32>
    %100 = vector.shape_cast %99 : vector<1x4x256xf32> to vector<4x256xf32>
    %101 = vector.shape_cast %98 : vector<4x256xf32> to vector<1x4x256xf32>
    tpu.vector_store %arg7[%c0_36, %c0_37, %c0_38], %101 {strides = array<i32>} : memref<1x4x256xf32, #tpu.memory_space<vmem>>, vector<1x4x256xf32>,
    return
  }
  func.func @transform_0(%arg0: i32, %arg1: i32, %arg2: memref<2xi32, #tpu.memory_space<smem>>, %arg3: memref<2xi32, #tpu.memory_space<smem>>) -> (i32, i32) {
    %c0_i32 = arith.constant 0 : i32
    %c0_i32_0 = arith.constant 0 : i32
    return %c0_i32, %arg1 : i32, i32
  }
  func.func @transform_1(%arg0: i32, %arg1: i32, %arg2: memref<2xi32, #tpu.memory_space<smem>>, %arg3: memref<2xi32, #tpu.memory_space<smem>>) -> (i32, i32, i32) {
    %c0_i32 = arith.constant 0 : i32
    %c0_i32_0 = arith.constant 0 : i32
    return %arg0, %c0_i32, %arg1 : i32, i32, i32
  }
  func.func @transform_2(%arg0: i32, %arg1: i32, %arg2: memref<2xi32, #tpu.memory_space<smem>>, %arg3: memref<2xi32, #tpu.memory_space<smem>>) -> (i32, i32, i32, i32) {
    %c0_i32 = arith.constant 0 : i32
    %c0_i32_0 = arith.constant 0 : i32
    %c0_i32_1 = arith.constant 0 : i32
    %c0_i32_2 = arith.constant 0 : i32
    return %arg0, %c0_i32, %c0_i32_0, %c0_i32_1 : i32, i32, i32, i32
  }
  func.func @transform_3(%arg0: i32, %arg1: i32, %arg2: memref<2xi32, #tpu.memory_space<smem>>, %arg3: memref<2xi32, #tpu.memory_space<smem>>) -> (i32, i32, i32) {
    %c0_i32 = arith.constant 0 : i32
    %c0_i32_0 = arith.constant 0 : i32
    return %arg0, %c0_i32, %arg1 : i32, i32, i32
  }
}

</mosaic_0001>

<llo_original>
// kernel: tpu_custom_call.1
$region0: #{tpu_custom_call.1}
  #allocation0 [shape = 'u32[]', space=smem, size = 0x4, offset = 0x4, fixed_abs, tag = 'smem constant byte address 0x4 - core index']
  #allocation1 [shape = 'u32[72,128]{1,0:T(1,128)}', space=vmem, size = 0x9000, scoped, tag = 'internal scratch']
  #allocation2 [shape = 's32[1]{0}', space=sflag, size = 0x4, scoped, tag = 'scoped memory for tpu_custom_call.1']
  #allocation3 [shape = 'u8[512]{0}', space=smem, size = 0x200, scoped, tag = 'prefetched SMEM operand 0']
  #allocation4 [shape = 'u8[512]{0}', space=smem, size = 0x200, scoped, tag = 'prefetched SMEM operand 1']
  %s0 = inlined_call_operand.hbm [shape: s32[2], index: 0, kind: input, shape index: {}]
  %s1 = inlined_call_operand.hbm [shape: s32[2], index: 1, kind: input, shape index: {}]
  %s2 = inlined_call_operand.hbm [shape: f32[2,256], index: 2, kind: input, shape index: {}]
  %s3 = inlined_call_operand.hbm [shape: f32[2,2,256], index: 3, kind: input, shape index: {}]
  %s4 = inlined_call_operand.hbm [shape: f32[2,1,4,256], index: 4, kind: input, shape index: {}]
  %s5 = inlined_call_operand.hbm [shape: f32[2,4,256], index: 5, kind: output, shape index: {}]
  %s6 = sld [smem:[#allocation0]]
  $region64: #{tpu_custom_call.1} parent=0
    _
  %s8 = ssub.s32 1, %s6
  %s9 = scalar_select 0, %s8, %s6
  %s11 = sshll.u32 %s0, 4
  %s12 = int_to_ptr.hbm [resolvable:$true] %s11
  %14 = dma.hbm_to_smem %s12, 16, [#allocation3], [#allocation2]
  %s16 = sshll.u32 %s1, 4
  %s17 = int_to_ptr.hbm [resolvable:$true] %s16
  %19 = dma.hbm_to_smem %s17, 16, [#allocation4], [#allocation2]
  %21 = dma.done [#allocation2], 32
  %22 = sfence
  $region1: #{tpu_custom_call.1} parent=0
    #allocation5 [shape = 'u8[2048]{0}', space=vmem, size = 0x800, scoped, tag = 'input window, operand 2, single buffered']
    #allocation6 [shape = 's32[2]{0}', space=sflag, size = 0x8, scoped, tag = 'scoped memory for tpu_custom_call.1']
    #allocation7 [shape = 's32[2]{0}', space=sflag, size = 0x8, scoped, tag = 'scoped memory for tpu_custom_call.1']
    #allocation8 [shape = 'u8[4096]{0}', space=vmem, size = 0x1000, scoped, tag = 'input window, operand 3']
    #allocation9 [shape = 's32[2]{0}', space=sflag, size = 0x8, scoped, tag = 'scoped memory for tpu_custom_call.1']
    #allocation10 [shape = 'u8[8192]{0}', space=vmem, size = 0x2000, scoped, tag = 'input window, operand 4']
    #allocation11 [shape = 'u8[8192]{0}', space=vmem, size = 0x2000, scoped, tag = 'output window, operand 0']
    %23 = vsyncpa [#allocation6], 0
    %24 = vsyncpa [#allocation9], 0
    %s25 = scalar_lea.sflag [#allocation9], 1
    %26 = vsyncpa %s25, 0
    %27 = vsyncpa [#allocation7], 0
    %s28 = scalar_lea.sflag [#allocation7], 1
    %29 = vsyncpa %s28, 0
    loop: start=0, step=1, limit=4
    $region2: #{tpu_custom_call.1} parent=1 // loop_pre_header
      _
    $region3: #{tpu_custom_call.1} parent=1 // loop_header
      %s31 = sphi 0, %s35
      %p32 = scmp.ge.s32.totalorder %s31, 4
      %s38 = sphi 0, %s50
      %s39 = sphi 0, %s46
      %s40 = sphi 0, %s38
      %s41 = sphi 0, %s39
      %s42 = sphi 0, %s40
      %s43 = sphi 0, %s41
      %s53 = sphi 0, %s55
      %s56 = sphi 0, %s53
      %s57 = sphi 0, %s56
      %s73 = sphi 0, %s57
      %s81 = sphi 0, %s83
      %s84 = sphi 0, %s81
      %s85 = sphi 0, %s84
      %s101 = sphi 0, %s85
      %s107 = sphi 0, %s109
      %s110 = sphi 0, %s107
      %s111 = sphi 0, %s110
      %s127 = sphi 0, %s111
      %s135 = sphi 0, %s137
      %s138 = sphi 0, %s135
      %s139 = sphi 0, %s138
      %s155 = sphi 0, %s139
    $region4: #{tpu_custom_call.1} parent=1 // loop_header_branch
      %34 = sbr.rel (%p32) target = $region8
    $region5: #{tpu_custom_call.1} parent=1 // loop_body
      %s36 = ssub.s32 %s31, 1
      %s37 = ssub.s32 %s31, 2
      %s44 = sadd.s32 1, %s39
      %p45 = scmp.ge.s32.totalorder %s44, 1
      %s46 = scalar_select %p45, 0, %s44
      %s47 = sadd.s32 1, %s38
      %s48 = scalar_select %p45, %s47, %s38
      %p49 = scmp.ge.s32.totalorder %s48, 2
      %s50 = scalar_select %p49, 0, %s48
      %s51 = ssub.s32 %s39, %s46
      %p52 = scmp.eq.s32.totalorder %s51, 0
      %s54 = sadd.s32 %s53, 1
      %s55 = scalar_select %p52, %s53, %s54
      %p58 = pneg %p52
      %p59 = scmp.eq.s32.totalorder %s31, 1
      %p60 = por %p58, %p59
      %p61 = scmp.ne.s32.totalorder %s53, %s56
      %p62 = scmp.eq.s32.totalorder %s31, 0
      %p63 = por %p61, %p62
      %p64 = scmp.ne.s32.totalorder %s53, %s56
      %p65 = scmp.eq.s32.totalorder %s36, 1
      %p66 = por %p64, %p65
      %p67 = scmp.ne.s32.totalorder %s56, %s57
      %p68 = scmp.eq.s32.totalorder %s36, 0
      %p69 = por %p67, %p68
      %p70 = scmp.ne.s32.totalorder %s56, %s57
      %p71 = scmp.eq.s32.totalorder %s37, 1
      %p72 = por %p70, %p71
      %p74 = scmp.ne.s32.totalorder %s57, %s73
      %p75 = scmp.eq.s32.totalorder %s37, 0
      %p76 = por %p74, %p75
      %s77 = ssub.s32 %s38, %s50
      %s78 = ssub.s32 %s39, %s46
      %s79 = sor.u32 %s77, %s78
      %p80 = scmp.eq.s32.totalorder %s79, 0
      %s82 = sadd.s32 %s81, 1
      %s83 = scalar_select %p80, %s81, %s82
      %p86 = pneg %p80
      %p87 = scmp.eq.s32.totalorder %s31, 1
      %p88 = por %p86, %p87
      %p89 = scmp.ne.s32.totalorder %s81, %s84
      %p90 = scmp.eq.s32.totalorder %s31, 0
      %p91 = por %p89, %p90
      %p92 = scmp.ne.s32.totalorder %s81, %s84
      %p93 = scmp.eq.s32.totalorder %s36, 1
      %p94 = por %p92, %p93
      %p95 = scmp.ne.s32.totalorder %s84, %s85
      %p96 = scmp.eq.s32.totalorder %s36, 0
      %p97 = por %p95, %p96
      %p98 = scmp.ne.s32.totalorder %s84, %s85
      %p99 = scmp.eq.s32.totalorder %s37, 1
      %p100 = por %p98, %p99
      %p102 = scmp.ne.s32.totalorder %s85, %s101
      %p103 = scmp.eq.s32.totalorder %s37, 0
      %p104 = por %p102, %p103
      %s105 = ssub.s32 %s38, %s50
      %p106 = scmp.eq.s32.totalorder %s105, 0
      %s108 = sadd.s32 %s107, 1
      %s109 = scalar_select %p106, %s107, %s108
      %p112 = pneg %p106
      %p113 = scmp.eq.s32.totalorder %s31, 1
      %p114 = por %p112, %p113
      %p115 = scmp.ne.s32.totalorder %s107, %s110
      %p116 = scmp.eq.s32.totalorder %s31, 0
      %p117 = por %p115, %p116
      %p118 = scmp.ne.s32.totalorder %s107, %s110
      %p119 = scmp.eq.s32.totalorder %s36, 1
      %p120 = por %p118, %p119
      %p121 = scmp.ne.s32.totalorder %s110, %s111
      %p122 = scmp.eq.s32.totalorder %s36, 0
      %p123 = por %p121, %p122
      %p124 = scmp.ne.s32.totalorder %s110, %s111
      %p125 = scmp.eq.s32.totalorder %s37, 1
      %p126 = por %p124, %p125
      %p128 = scmp.ne.s32.totalorder %s111, %s127
      %p129 = scmp.eq.s32.totalorder %s37, 0
      %p130 = por %p128, %p129
      %s131 = ssub.s32 %s38, %s50
      %s132 = ssub.s32 %s39, %s46
      %s133 = sor.u32 %s131, %s132
      %p134 = scmp.eq.s32.totalorder %s133, 0
      %s136 = sadd.s32 %s135, 1
      %s137 = scalar_select %p134, %s135, %s136
      %p140 = pneg %p134
      %p141 = scmp.eq.s32.totalorder %s31, 1
      %p142 = por %p140, %p141
      %p143 = scmp.ne.s32.totalorder %s135, %s138
      %p144 = scmp.eq.s32.totalorder %s31, 0
      %p145 = por %p143, %p144
      %p146 = scmp.ne.s32.totalorder %s135, %s138
      %p147 = scmp.eq.s32.totalorder %s36, 1
      %p148 = por %p146, %p147
      %p149 = scmp.ne.s32.totalorder %s138, %s139
      %p150 = scmp.eq.s32.totalorder %s36, 0
      %p151 = por %p149, %p150
      %p152 = scmp.ne.s32.totalorder %s138, %s139
      %p153 = scmp.eq.s32.totalorder %s37, 1
      %p154 = por %p152, %p153
      %p156 = scmp.ne.s32.totalorder %s139, %s155
      %p157 = scmp.eq.s32.totalorder %s37, 0
      %p158 = por %p156, %p157
      %p159 = scmp.le.s32.totalorder 1, %s31
      %p160 = scmp.lt.s32.totalorder %s31, 3
      %p161 = pnand %p159, %p160
      %p162 = pneg %p161
      // Predicated region
      $region9: #{tpu_custom_call.1} parent=5 // pred_check
        _
      $region10: #{tpu_custom_call.1} parent=5 // pred_check_branch
        %164 = sbr.rel (%p161) target = $region12
      $region11: #{tpu_custom_call.1} parent=5 // pred_region
        %s165 = ssub.s32 %s31, 1
        // Predicated region
        $region13: #{tpu_custom_call.1} parent=11 // pred_check
          %p166 = pneg %p69
        $region14: #{tpu_custom_call.1} parent=11 // pred_check_branch
          %168 = sbr.rel (%p166) target = $region16
        $region15: #{tpu_custom_call.1} parent=11 // pred_region
          %s169 = smul.u32 2, %s41
          %171 = vsyncadd [#allocation6], 0
          %s172 = smul.addr %s169, 2
          %s173 = scalar_lea.hbm %s2, %s172
          %s175 = sshll.u32 %s173, 4
          %s176 = int_to_ptr.hbm [resolvable:$true] %s175
          %s177 = sshll.u32 [#allocation5], 4
          %s178 = int_to_ptr.vmem [resolvable:$true] %s177
          %180 = dma.hbm_to_vmem [thread:$0]  %s176, 64, %s178, [#allocation6]
        $region16: #{tpu_custom_call.1} parent=11 // pred_fallthru
          _
      $region12: #{tpu_custom_call.1} parent=5 // pred_fallthru
        _
      %p181 = scmp.lt.s32.totalorder %s31, 2
      // Predicated region
      $region17: #{tpu_custom_call.1} parent=5 // pred_check
        %p182 = pneg %p181
      $region18: #{tpu_custom_call.1} parent=5 // pred_check_branch
        %184 = sbr.rel (%p182) target = $region20
      $region19: #{tpu_custom_call.1} parent=5 // pred_region
        // Predicated region
        $region21: #{tpu_custom_call.1} parent=19 // pred_check
          %p185 = pneg %p91
        $region22: #{tpu_custom_call.1} parent=19 // pred_check_branch
          %187 = sbr.rel (%p185) target = $region24
        $region23: #{tpu_custom_call.1} parent=19 // pred_region
          %s188 = sand.u32 %s31, 1
          %s189 = scalar_lea.sflag [#allocation9], %s188
          %s190 = sand.u32 %s81, 1
          %s191 = smul.addr %s190, 4
          %s192 = scalar_lea.vmem [#allocation8], %s191
          %s193 = smul.u32 2, %s39
          %195 = vsyncadd %s189, 0
          %s196 = smul.addr %s38, 2
          %s197 = sadd.s32 %s193, %s196
          %s198 = smul.addr %s197, 2
          %s199 = scalar_lea.hbm %s3, %s198
          %s201 = sshll.u32 %s199, 4
          %s202 = int_to_ptr.hbm [resolvable:$true] %s201
          %s203 = sshll.u32 %s192, 4
          %s204 = int_to_ptr.vmem [resolvable:$true] %s203
          %206 = dma.hbm_to_vmem [thread:$0]  %s202, 64, %s204, %s189
        $region24: #{tpu_custom_call.1} parent=19 // pred_fallthru
          _
        // Predicated region
        $region25: #{tpu_custom_call.1} parent=19 // pred_check
          %p207 = pneg %p117
        $region26: #{tpu_custom_call.1} parent=19 // pred_check_branch
          %209 = sbr.rel (%p207) target = $region28
        $region27: #{tpu_custom_call.1} parent=19 // pred_region
          %s210 = sand.u32 %s31, 1
          %s211 = scalar_lea.sflag [#allocation9], %s210
          %s212 = sand.u32 %s107, 1
          %s213 = smul.addr %s212, 8
          %s214 = scalar_lea.vmem [#allocation10], %s213
          %216 = vsyncadd %s211, 0
          %s217 = smul.addr %s38, 2
          %s218 = smul.addr %s217, 4
          %s219 = scalar_lea.hbm %s4, %s218
          %s221 = sshll.u32 %s219, 4
          %s222 = int_to_ptr.hbm [resolvable:$true] %s221
          %s223 = sshll.u32 %s214, 4
          %s224 = int_to_ptr.vmem [resolvable:$true] %s223
          %226 = dma.hbm_to_vmem [thread:$0]  %s222, 128, %s224, %s211
        $region28: #{tpu_custom_call.1} parent=19 // pred_fallthru
          _
      $region20: #{tpu_custom_call.1} parent=5 // pred_fallthru
        _
      %p227 = scmp.le.s32.totalorder 1, %s31
      %p228 = scmp.lt.s32.totalorder %s31, 3
      %p229 = pnand %p227, %p228
      %p230 = pneg %p229
      // Predicated region
      $region29: #{tpu_custom_call.1} parent=5 // pred_check
        _
      $region30: #{tpu_custom_call.1} parent=5 // pred_check_branch
        %232 = sbr.rel (%p229) target = $region32
      $region31: #{tpu_custom_call.1} parent=5 // pred_region
        %s233 = ssub.s32 %s31, 1
        // Predicated region
        $region33: #{tpu_custom_call.1} parent=31 // pred_check
          %p234 = pneg %p69
        $region34: #{tpu_custom_call.1} parent=31 // pred_check_branch
          %236 = sbr.rel (%p234) target = $region36
        $region35: #{tpu_custom_call.1} parent=31 // pred_region
          %238 = dma.done [#allocation6], 64
        $region36: #{tpu_custom_call.1} parent=31 // pred_fallthru
          _
        %s239 = sand.u32 %s36, 1
        %s240 = scalar_lea.sflag [#allocation9], %s239
        %s241 = sand.u32 %s84, 1
        %s242 = smul.addr %s241, 4
        %s243 = scalar_lea.vmem [#allocation8], %s242
        // Predicated region
        $region37: #{tpu_custom_call.1} parent=31 // pred_check
          %p244 = pneg %p97
        $region38: #{tpu_custom_call.1} parent=31 // pred_check_branch
          %246 = sbr.rel (%p244) target = $region40
        $region39: #{tpu_custom_call.1} parent=31 // pred_region
          %248 = dma.done %s240, 64
        $region40: #{tpu_custom_call.1} parent=31 // pred_fallthru
          _
        %s249 = sand.u32 %s36, 1
        %s250 = scalar_lea.sflag [#allocation9], %s249
        %s251 = sand.u32 %s110, 1
        %s252 = smul.addr %s251, 8
        %s253 = scalar_lea.vmem [#allocation10], %s252
        // Predicated region
        $region41: #{tpu_custom_call.1} parent=31 // pred_check
          %p254 = pneg %p123
        $region42: #{tpu_custom_call.1} parent=31 // pred_check_branch
          %256 = sbr.rel (%p254) target = $region44
        $region43: #{tpu_custom_call.1} parent=31 // pred_region
          %258 = dma.done %s250, 128
        $region44: #{tpu_custom_call.1} parent=31 // pred_fallthru
          _
        %p259 = pneg %p69
        %p260 = pneg %p66
        %s261 = sand.u32 %s36, 1
        %s262 = scalar_lea.sflag [#allocation9], %s261
        %s263 = sand.u32 %s84, 1
        %s264 = smul.addr %s263, 4
        %s265 = scalar_lea.vmem [#allocation8], %s264
        %p266 = pneg %p97
        %p267 = pneg %p94
        %s268 = sand.u32 %s36, 1
        %s269 = scalar_lea.sflag [#allocation9], %s268
        %s270 = sand.u32 %s110, 1
        %s271 = smul.addr %s270, 8
        %s272 = scalar_lea.vmem [#allocation10], %s271
        %p273 = pneg %p123
        %p274 = pneg %p120
        %p275 = pneg %p151
        %p276 = pneg %p148
        %s277 = sand.u32 %s138, 1
        %s278 = scalar_lea.sflag [#allocation7], %s277
        %s279 = sand.u32 %s138, 1
        %s280 = smul.addr %s279, 8
        %s281 = scalar_lea.vmem [#allocation11], %s280
        %s282 = smul.u32 2, %s41
        %s283 = smul.u32 2, %s41
        %s284 = smul.u32 2, %s41
        %v285 = vld [vmem:[#allocation5] ss:$2 sm:$0x3]
        %s286 = scalar_lea.vmem [#allocation5], 1
        %v287 = vld [vmem:[%s286] ss:$2 sm:$0x3]
        %v288 = vld [vmem:[%s243] sm:$0xf]
        %v290 = vrot.slane %v288, 1
        %v291 = vrot.slane %v288, 2
        %v292 = vrot.slane %v288, 3
        %vm293 = vcmask 1040384
        %v294 = vsel %vm293, %v288, %v290
        %vm295 = vcmask 1042434
        %v296 = vsel %vm295, %v291, %v292
        %vm297 = vcmask 1041408
        %v298 = vsel %vm297, %v294, %v296
        %v300 = vadd.f32 %v285, %v298
        %301 = vst [vmem:[#allocation1] sm:$0xff] %v288
        %s302 = scalar_lea.vmem [#allocation1], 1
        %v303 = vld [vmem:[%s302] ss:$2 sm:$0xff]
        %v305 = vadd.f32 %v287, %v303
        %v306 = vrcp.pop 15.0
        %v307 = vmul.f32 15.0, %v306
        %v308 = vsub.f32 1.0, %v307
        %v309 = vmul.f32 %v306, %v308
        %v310 = vadd.f32 %v306, %v309
        %vm311 = vweird.f32 %v306
        %v312 = vsel %vm311, %v306, %v310
        %v313 = vmul.f32 %v300, %v312
        %v314 = vsub.f32 %v313, 0.5
        %v315 = vmul.f32 %v314, 2.0
        %v316 = vmul.f32 %v305, %v312
        %v317 = vsub.f32 %v316, 0.5
        %v318 = vmul.f32 %v317, 2.0
        %v319 = vadd.f32 %v315, 1.0
        %v320 = vmul.f32 %v319, 16.0
        %v321 = vsub.f32 %v320, 1.0
        %v322 = vmul.f32 %v321, 0.5
        %v323 = vadd.f32 %v318, 1.0
        %v324 = vmul.f32 %v323, 16.0
        %v325 = vsub.f32 %v324, 1.0
        %v326 = vmul.f32 %v325, 0.5
        %v327 = vfloor.f32 %v322
        %v328 = vfloor.f32 %v326
        %v329 = vsub.f32 %v322, %v327
        %v330 = vsub.f32 1.0, %v329
        %v331 = vsub.f32 %v326, %v328
        %v332 = vsub.f32 1.0, %v331
        %v333 = vcvt.f32.s32.to.zero.pseudo %v327
        %v334 = vcvt.f32.s32.to.zero.pseudo %v328
        %v335 = vadd.s32 %v333, 1
        %v336 = vadd.s32 %v334, 1
        %vm337 = vcmp.ge.s32.totalorder %v333, 0
        %vm338 = vcmp.lt.s32.totalorder %v333, 16
        %vm339 = vmand %vm337, %vm338
        %vm340 = vcmp.ge.s32.totalorder %v335, 0
        %vm341 = vcmp.lt.s32.totalorder %v335, 16
        %vm342 = vmand %vm340, %vm341
        %vm343 = vcmp.ge.s32.totalorder %v334, 0
        %vm344 = vcmp.lt.s32.totalorder %v334, 16
        %vm345 = vmand %vm343, %vm344
        %vm346 = vcmp.ge.s32.totalorder %v336, 0
        %vm347 = vcmp.lt.s32.totalorder %v336, 16
        %vm348 = vmand %vm346, %vm347
        %vm349 = vmand %vm339, %vm345
        %v350 = vmul.f32 %v330, %v332
        %v351 = vsel %vm349, %v350, 0.0
        %vm352 = vmand %vm339, %vm348
        %v353 = vmul.f32 %v330, %v331
        %v354 = vsel %vm352, %v353, 0.0
        %vm355 = vmand %vm342, %vm345
        %v356 = vmul.f32 %v329, %v332
        %v357 = vsel %vm355, %v356, 0.0
        %vm358 = vmand %vm342, %vm348
        %v359 = vmul.f32 %v329, %v331
        %v360 = vsel %vm358, %v359, 0.0
        %v361 = vmul.u32 %v333, 16
        %v362 = vadd.s32 %v361, %v334
        %s363 = sadd.s32 %s40, %s41
        %s364 = sld [smem:[#allocation3 + %s363]]
        %s365 = sld [smem:[#allocation4 + %s363]]
        // While loop
        $region45: #{tpu_custom_call.1} parent=31 // loop_pre_header
          _
        $region46: #{tpu_custom_call.1} parent=31 // loop_header
          %s367 = sphi %s364, %s369
          %p368 = scmp.ge.s32.totalorder %s367, %s365
          %v372 = vphi 0.0, %v1098
          %v373 = vphi 0.0, %v1099
        $region47: #{tpu_custom_call.1} parent=31 // loop_header_branch
          %371 = sbr.rel (%p368) target = $region51
        $region48: #{tpu_custom_call.1} parent=31 // loop_body
          %s374 = smul.u32 %s367, 256
          %v375 = vstv %s374
          %v376 = vsub.s32 %v362, %v375
          %v377 = vlaneseq
          %v378 = vshrl.u32 %v377, 7
          %v379 = vadd.s32 %v378, 8
          %v380 = vadd.s32 %v378, 16
          %v381 = vadd.s32 %v378, 24
          %v382 = vadd.s32 %v378, 32
          %v383 = vadd.s32 %v378, 40
          %v384 = vadd.s32 %v378, 48
          %v385 = vadd.s32 %v378, 56
          %v386 = vadd.s32 %v378, 64
          %v387 = vadd.s32 %v378, 72
          %v388 = vadd.s32 %v378, 80
          %v389 = vadd.s32 %v378, 88
          %v390 = vadd.s32 %v378, 96
          %v391 = vadd.s32 %v378, 104
          %v392 = vadd.s32 %v378, 112
          %v393 = vadd.s32 %v378, 120
          %v394 = vadd.s32 %v378, 128
          %v395 = vadd.s32 %v378, 136
          %v396 = vadd.s32 %v378, 144
          %v397 = vadd.s32 %v378, 152
          %v398 = vadd.s32 %v378, 160
          %v399 = vadd.s32 %v378, 168
          %v400 = vadd.s32 %v378, 176
          %v401 = vadd.s32 %v378, 184
          %v402 = vadd.s32 %v378, 192
          %v403 = vadd.s32 %v378, 200
          %v404 = vadd.s32 %v378, 208
          %v405 = vadd.s32 %v378, 216
          %v406 = vadd.s32 %v378, 224
          %v407 = vadd.s32 %v378, 232
          %v408 = vadd.s32 %v378, 240
          %v409 = vadd.s32 %v378, 248
          %v410 = vperm.slane %v376, 0
          %v411 = vperm.slane %v376, 1
          %v412 = vsub.s32 %v378, %v410
          %v413 = vsub.s32 %v378, %v411
          %v414 = vsub.s32 %v379, %v410
          %v415 = vsub.s32 %v379, %v411
          %v416 = vsub.s32 %v380, %v410
          %v417 = vsub.s32 %v380, %v411
          %v418 = vsub.s32 %v381, %v410
          %v419 = vsub.s32 %v381, %v411
          %v420 = vsub.s32 %v382, %v410
          %v421 = vsub.s32 %v382, %v411
          %v422 = vsub.s32 %v383, %v410
          %v423 = vsub.s32 %v383, %v411
          %v424 = vsub.s32 %v384, %v410
          %v425 = vsub.s32 %v384, %v411
          %v426 = vsub.s32 %v385, %v410
          %v427 = vsub.s32 %v385, %v411
          %v428 = vsub.s32 %v386, %v410
          %v429 = vsub.s32 %v386, %v411
          %v430 = vsub.s32 %v387, %v410
          %v431 = vsub.s32 %v387, %v411
          %v432 = vsub.s32 %v388, %v410
          %v433 = vsub.s32 %v388, %v411
          %v434 = vsub.s32 %v389, %v410
          %v435 = vsub.s32 %v389, %v411
          %v436 = vsub.s32 %v390, %v410
          %v437 = vsub.s32 %v390, %v411
          %v438 = vsub.s32 %v391, %v410
          %v439 = vsub.s32 %v391, %v411
          %v440 = vsub.s32 %v392, %v410
          %v441 = vsub.s32 %v392, %v411
          %v442 = vsub.s32 %v393, %v410
          %v443 = vsub.s32 %v393, %v411
          %v444 = vsub.s32 %v394, %v410
          %v445 = vsub.s32 %v394, %v411
          %v446 = vsub.s32 %v395, %v410
          %v447 = vsub.s32 %v395, %v411
          %v448 = vsub.s32 %v396, %v410
          %v449 = vsub.s32 %v396, %v411
          %v450 = vsub.s32 %v397, %v410
          %v451 = vsub.s32 %v397, %v411
          %v452 = vsub.s32 %v398, %v410
          %v453 = vsub.s32 %v398, %v411
          %v454 = vsub.s32 %v399, %v410
          %v455 = vsub.s32 %v399, %v411
          %v456 = vsub.s32 %v400, %v410
          %v457 = vsub.s32 %v400, %v411
          %v458 = vsub.s32 %v401, %v410
          %v459 = vsub.s32 %v401, %v411
          %v460 = vsub.s32 %v402, %v410
          %v461 = vsub.s32 %v402, %v411
          %v462 = vsub.s32 %v403, %v410
          %v463 = vsub.s32 %v403, %v411
          %v464 = vsub.s32 %v404, %v410
          %v465 = vsub.s32 %v404, %v411
          %v466 = vsub.s32 %v405, %v410
          %v467 = vsub.s32 %v405, %v411
          %v468 = vsub.s32 %v406, %v410
          %v469 = vsub.s32 %v406, %v411
          %v470 = vsub.s32 %v407, %v410
          %v471 = vsub.s32 %v407, %v411
          %v472 = vsub.s32 %v408, %v410
          %v473 = vsub.s32 %v408, %v411
          %v474 = vsub.s32 %v409, %v410
          %v475 = vsub.s32 %v409, %v411
          %vm476 = vcmp.eq.s32.totalorder %v412, 0
          %vm477 = vcmp.eq.s32.totalorder %v413, 0
          %vm478 = vcmp.eq.s32.totalorder %v414, 0
          %vm479 = vcmp.eq.s32.totalorder %v415, 0
          %vm480 = vcmp.eq.s32.totalorder %v416, 0
          %vm481 = vcmp.eq.s32.totalorder %v417, 0
          %vm482 = vcmp.eq.s32.totalorder %v418, 0
          %vm483 = vcmp.eq.s32.totalorder %v419, 0
          %vm484 = vcmp.eq.s32.totalorder %v420, 0
          %vm485 = vcmp.eq.s32.totalorder %v421, 0
          %vm486 = vcmp.eq.s32.totalorder %v422, 0
          %vm487 = vcmp.eq.s32.totalorder %v423, 0
          %vm488 = vcmp.eq.s32.totalorder %v424, 0
          %vm489 = vcmp.eq.s32.totalorder %v425, 0
          %vm490 = vcmp.eq.s32.totalorder %v426, 0
          %vm491 = vcmp.eq.s32.totalorder %v427, 0
          %vm492 = vcmp.eq.s32.totalorder %v428, 0
          %vm493 = vcmp.eq.s32.totalorder %v429, 0
          %vm494 = vcmp.eq.s32.totalorder %v430, 0
          %vm495 = vcmp.eq.s32.totalorder %v431, 0
          %vm496 = vcmp.eq.s32.totalorder %v432, 0
          %vm497 = vcmp.eq.s32.totalorder %v433, 0
          %vm498 = vcmp.eq.s32.totalorder %v434, 0
          %vm499 = vcmp.eq.s32.totalorder %v435, 0
          %vm500 = vcmp.eq.s32.totalorder %v436, 0
          %vm501 = vcmp.eq.s32.totalorder %v437, 0
          %vm502 = vcmp.eq.s32.totalorder %v438, 0
          %vm503 = vcmp.eq.s32.totalorder %v439, 0
          %vm504 = vcmp.eq.s32.totalorder %v440, 0
          %vm505 = vcmp.eq.s32.totalorder %v441, 0
          %vm506 = vcmp.eq.s32.totalorder %v442, 0
          %vm507 = vcmp.eq.s32.totalorder %v443, 0
          %vm508 = vcmp.eq.s32.totalorder %v444, 0
          %vm509 = vcmp.eq.s32.totalorder %v445, 0
          %vm510 = vcmp.eq.s32.totalorder %v446, 0
          %vm511 = vcmp.eq.s32.totalorder %v447, 0
          %vm512 = vcmp.eq.s32.totalorder %v448, 0
          %vm513 = vcmp.eq.s32.totalorder %v449, 0
          %vm514 = vcmp.eq.s32.totalorder %v450, 0
          %vm515 = vcmp.eq.s32.totalorder %v451, 0
          %vm516 = vcmp.eq.s32.totalorder %v452, 0
          %vm517 = vcmp.eq.s32.totalorder %v453, 0
          %vm518 = vcmp.eq.s32.totalorder %v454, 0
          %vm519 = vcmp.eq.s32.totalorder %v455, 0
          %vm520 = vcmp.eq.s32.totalorder %v456, 0
          %vm521 = vcmp.eq.s32.totalorder %v457, 0
          %vm522 = vcmp.eq.s32.totalorder %v458, 0
          %vm523 = vcmp.eq.s32.totalorder %v459, 0
          %vm524 = vcmp.eq.s32.totalorder %v460, 0
          %vm525 = vcmp.eq.s32.totalorder %v461, 0
          %vm526 = vcmp.eq.s32.totalorder %v462, 0
          %vm527 = vcmp.eq.s32.totalorder %v463, 0
          %vm528 = vcmp.eq.s32.totalorder %v464, 0
          %vm529 = vcmp.eq.s32.totalorder %v465, 0
          %vm530 = vcmp.eq.s32.totalorder %v466, 0
          %vm531 = vcmp.eq.s32.totalorder %v467, 0
          %vm532 = vcmp.eq.s32.totalorder %v468, 0
          %vm533 = vcmp.eq.s32.totalorder %v469, 0
          %vm534 = vcmp.eq.s32.totalorder %v470, 0
          %vm535 = vcmp.eq.s32.totalorder %v471, 0
          %vm536 = vcmp.eq.s32.totalorder %v472, 0
          %vm537 = vcmp.eq.s32.totalorder %v473, 0
          %vm538 = vcmp.eq.s32.totalorder %v474, 0
          %vm539 = vcmp.eq.s32.totalorder %v475, 0
          %vm540 = vcmp.eq.s32.totalorder %v412, 1
          %vm541 = vcmp.eq.s32.totalorder %v413, 1
          %vm542 = vcmp.eq.s32.totalorder %v414, 1
          %vm543 = vcmp.eq.s32.totalorder %v415, 1
          %vm544 = vcmp.eq.s32.totalorder %v416, 1
          %vm545 = vcmp.eq.s32.totalorder %v417, 1
          %vm546 = vcmp.eq.s32.totalorder %v418, 1
          %vm547 = vcmp.eq.s32.totalorder %v419, 1
          %vm548 = vcmp.eq.s32.totalorder %v420, 1
          %vm549 = vcmp.eq.s32.totalorder %v421, 1
          %vm550 = vcmp.eq.s32.totalorder %v422, 1
          %vm551 = vcmp.eq.s32.totalorder %v423, 1
          %vm552 = vcmp.eq.s32.totalorder %v424, 1
          %vm553 = vcmp.eq.s32.totalorder %v425, 1
          %vm554 = vcmp.eq.s32.totalorder %v426, 1
          %vm555 = vcmp.eq.s32.totalorder %v427, 1
          %vm556 = vcmp.eq.s32.totalorder %v428, 1
          %vm557 = vcmp.eq.s32.totalorder %v429, 1
          %vm558 = vcmp.eq.s32.totalorder %v430, 1
          %vm559 = vcmp.eq.s32.totalorder %v431, 1
          %vm560 = vcmp.eq.s32.totalorder %v432, 1
          %vm561 = vcmp.eq.s32.totalorder %v433, 1
          %vm562 = vcmp.eq.s32.totalorder %v434, 1
          %vm563 = vcmp.eq.s32.totalorder %v435, 1
          %vm564 = vcmp.eq.s32.totalorder %v436, 1
          %vm565 = vcmp.eq.s32.totalorder %v437, 1
          %vm566 = vcmp.eq.s32.totalorder %v438, 1
          %vm567 = vcmp.eq.s32.totalorder %v439, 1
          %vm568 = vcmp.eq.s32.totalorder %v440, 1
          %vm569 = vcmp.eq.s32.totalorder %v441, 1
          %vm570 = vcmp.eq.s32.totalorder %v442, 1
          %vm571 = vcmp.eq.s32.totalorder %v443, 1
          %vm572 = vcmp.eq.s32.totalorder %v444, 1
          %vm573 = vcmp.eq.s32.totalorder %v445, 1
          %vm574 = vcmp.eq.s32.totalorder %v446, 1
          %vm575 = vcmp.eq.s32.totalorder %v447, 1
          %vm576 = vcmp.eq.s32.totalorder %v448, 1
          %vm577 = vcmp.eq.s32.totalorder %v449, 1
          %vm578 = vcmp.eq.s32.totalorder %v450, 1
          %vm579 = vcmp.eq.s32.totalorder %v451, 1
          %vm580 = vcmp.eq.s32.totalorder %v452, 1
          %vm581 = vcmp.eq.s32.totalorder %v453, 1
          %vm582 = vcmp.eq.s32.totalorder %v454, 1
          %vm583 = vcmp.eq.s32.totalorder %v455, 1
          %vm584 = vcmp.eq.s32.totalorder %v456, 1
          %vm585 = vcmp.eq.s32.totalorder %v457, 1
          %vm586 = vcmp.eq.s32.totalorder %v458, 1
          %vm587 = vcmp.eq.s32.totalorder %v459, 1
          %vm588 = vcmp.eq.s32.totalorder %v460, 1
          %vm589 = vcmp.eq.s32.totalorder %v461, 1
          %vm590 = vcmp.eq.s32.totalorder %v462, 1
          %vm591 = vcmp.eq.s32.totalorder %v463, 1
          %vm592 = vcmp.eq.s32.totalorder %v464, 1
          %vm593 = vcmp.eq.s32.totalorder %v465, 1
          %vm594 = vcmp.eq.s32.totalorder %v466, 1
          %vm595 = vcmp.eq.s32.totalorder %v467, 1
          %vm596 = vcmp.eq.s32.totalorder %v468, 1
          %vm597 = vcmp.eq.s32.totalorder %v469, 1
          %vm598 = vcmp.eq.s32.totalorder %v470, 1
          %vm599 = vcmp.eq.s32.totalorder %v471, 1
          %vm600 = vcmp.eq.s32.totalorder %v472, 1
          %vm601 = vcmp.eq.s32.totalorder %v473, 1
          %vm602 = vcmp.eq.s32.totalorder %v474, 1
          %vm603 = vcmp.eq.s32.totalorder %v475, 1
          %vm604 = vcmp.eq.s32.totalorder %v412, 16
          %vm605 = vcmp.eq.s32.totalorder %v413, 16
          %vm606 = vcmp.eq.s32.totalorder %v414, 16
          %vm607 = vcmp.eq.s32.totalorder %v415, 16
          %vm608 = vcmp.eq.s32.totalorder %v416, 16
          %vm609 = vcmp.eq.s32.totalorder %v417, 16
          %vm610 = vcmp.eq.s32.totalorder %v418, 16
          %vm611 = vcmp.eq.s32.totalorder %v419, 16
          %vm612 = vcmp.eq.s32.totalorder %v420, 16
          %vm613 = vcmp.eq.s32.totalorder %v421, 16
          %vm614 = vcmp.eq.s32.totalorder %v422, 16
          %vm615 = vcmp.eq.s32.totalorder %v423, 16
          %vm616 = vcmp.eq.s32.totalorder %v424, 16
          %vm617 = vcmp.eq.s32.totalorder %v425, 16
          %vm618 = vcmp.eq.s32.totalorder %v426, 16
          %vm619 = vcmp.eq.s32.totalorder %v427, 16
          %vm620 = vcmp.eq.s32.totalorder %v428, 16
          %vm621 = vcmp.eq.s32.totalorder %v429, 16
          %vm622 = vcmp.eq.s32.totalorder %v430, 16
          %vm623 = vcmp.eq.s32.totalorder %v431, 16
          %vm624 = vcmp.eq.s32.totalorder %v432, 16
          %vm625 = vcmp.eq.s32.totalorder %v433, 16
          %vm626 = vcmp.eq.s32.totalorder %v434, 16
          %vm627 = vcmp.eq.s32.totalorder %v435, 16
          %vm628 = vcmp.eq.s32.totalorder %v436, 16
          %vm629 = vcmp.eq.s32.totalorder %v437, 16
          %vm630 = vcmp.eq.s32.totalorder %v438, 16
          %vm631 = vcmp.eq.s32.totalorder %v439, 16
          %vm632 = vcmp.eq.s32.totalorder %v440, 16
          %vm633 = vcmp.eq.s32.totalorder %v441, 16
          %vm634 = vcmp.eq.s32.totalorder %v442, 16
          %vm635 = vcmp.eq.s32.totalorder %v443, 16
          %vm636 = vcmp.eq.s32.totalorder %v444, 16
          %vm637 = vcmp.eq.s32.totalorder %v445, 16
          %vm638 = vcmp.eq.s32.totalorder %v446, 16
          %vm639 = vcmp.eq.s32.totalorder %v447, 16
          %vm640 = vcmp.eq.s32.totalorder %v448, 16
          %vm641 = vcmp.eq.s32.totalorder %v449, 16
          %vm642 = vcmp.eq.s32.totalorder %v450, 16
          %vm643 = vcmp.eq.s32.totalorder %v451, 16
          %vm644 = vcmp.eq.s32.totalorder %v452, 16
          %vm645 = vcmp.eq.s32.totalorder %v453, 16
          %vm646 = vcmp.eq.s32.totalorder %v454, 16
          %vm647 = vcmp.eq.s32.totalorder %v455, 16
          %vm648 = vcmp.eq.s32.totalorder %v456, 16
          %vm649 = vcmp.eq.s32.totalorder %v457, 16
          %vm650 = vcmp.eq.s32.totalorder %v458, 16
          %vm651 = vcmp.eq.s32.totalorder %v459, 16
          %vm652 = vcmp.eq.s32.totalorder %v460, 16
          %vm653 = vcmp.eq.s32.totalorder %v461, 16
          %vm654 = vcmp.eq.s32.totalorder %v462, 16
          %vm655 = vcmp.eq.s32.totalorder %v463, 16
          %vm656 = vcmp.eq.s32.totalorder %v464, 16
          %vm657 = vcmp.eq.s32.totalorder %v465, 16
          %vm658 = vcmp.eq.s32.totalorder %v466, 16
          %vm659 = vcmp.eq.s32.totalorder %v467, 16
          %vm660 = vcmp.eq.s32.totalorder %v468, 16
          %vm661 = vcmp.eq.s32.totalorder %v469, 16
          %vm662 = vcmp.eq.s32.totalorder %v470, 16
          %vm663 = vcmp.eq.s32.totalorder %v471, 16
          %vm664 = vcmp.eq.s32.totalorder %v472, 16
          %vm665 = vcmp.eq.s32.totalorder %v473, 16
          %vm666 = vcmp.eq.s32.totalorder %v474, 16
          %vm667 = vcmp.eq.s32.totalorder %v475, 16
          %vm668 = vcmp.eq.s32.totalorder %v412, 17
          %vm669 = vcmp.eq.s32.totalorder %v413, 17
          %vm670 = vcmp.eq.s32.totalorder %v414, 17
          %vm671 = vcmp.eq.s32.totalorder %v415, 17
          %vm672 = vcmp.eq.s32.totalorder %v416, 17
          %vm673 = vcmp.eq.s32.totalorder %v417, 17
          %vm674 = vcmp.eq.s32.totalorder %v418, 17
          %vm675 = vcmp.eq.s32.totalorder %v419, 17
          %vm676 = vcmp.eq.s32.totalorder %v420, 17
          %vm677 = vcmp.eq.s32.totalorder %v421, 17
          %vm678 = vcmp.eq.s32.totalorder %v422, 17
          %vm679 = vcmp.eq.s32.totalorder %v423, 17
          %vm680 = vcmp.eq.s32.totalorder %v424, 17
          %vm681 = vcmp.eq.s32.totalorder %v425, 17
          %vm682 = vcmp.eq.s32.totalorder %v426, 17
          %vm683 = vcmp.eq.s32.totalorder %v427, 17
          %vm684 = vcmp.eq.s32.totalorder %v428, 17
          %vm685 = vcmp.eq.s32.totalorder %v429, 17
          %vm686 = vcmp.eq.s32.totalorder %v430, 17
          %vm687 = vcmp.eq.s32.totalorder %v431, 17
          %vm688 = vcmp.eq.s32.totalorder %v432, 17
          %vm689 = vcmp.eq.s32.totalorder %v433, 17
          %vm690 = vcmp.eq.s32.totalorder %v434, 17
          %vm691 = vcmp.eq.s32.totalorder %v435, 17
          %vm692 = vcmp.eq.s32.totalorder %v436, 17
          %vm693 = vcmp.eq.s32.totalorder %v437, 17
          %vm694 = vcmp.eq.s32.totalorder %v438, 17
          %vm695 = vcmp.eq.s32.totalorder %v439, 17
          %vm696 = vcmp.eq.s32.totalorder %v440, 17
          %vm697 = vcmp.eq.s32.totalorder %v441, 17
          %vm698 = vcmp.eq.s32.totalorder %v442, 17
          %vm699 = vcmp.eq.s32.totalorder %v443, 17
          %vm700 = vcmp.eq.s32.totalorder %v444, 17
          %vm701 = vcmp.eq.s32.totalorder %v445, 17
          %vm702 = vcmp.eq.s32.totalorder %v446, 17
          %vm703 = vcmp.eq.s32.totalorder %v447, 17
          %vm704 = vcmp.eq.s32.totalorder %v448, 17
          %vm705 = vcmp.eq.s32.totalorder %v449, 17
          %vm706 = vcmp.eq.s32.totalorder %v450, 17
          %vm707 = vcmp.eq.s32.totalorder %v451, 17
          %vm708 = vcmp.eq.s32.totalorder %v452, 17
          %vm709 = vcmp.eq.s32.totalorder %v453, 17
          %vm710 = vcmp.eq.s32.totalorder %v454, 17
          %vm711 = vcmp.eq.s32.totalorder %v455, 17
          %vm712 = vcmp.eq.s32.totalorder %v456, 17
          %vm713 = vcmp.eq.s32.totalorder %v457, 17
          %vm714 = vcmp.eq.s32.totalorder %v458, 17
          %vm715 = vcmp.eq.s32.totalorder %v459, 17
          %vm716 = vcmp.eq.s32.totalorder %v460, 17
          %vm717 = vcmp.eq.s32.totalorder %v461, 17
          %vm718 = vcmp.eq.s32.totalorder %v462, 17
          %vm719 = vcmp.eq.s32.totalorder %v463, 17
          %vm720 = vcmp.eq.s32.totalorder %v464, 17
          %vm721 = vcmp.eq.s32.totalorder %v465, 17
          %vm722 = vcmp.eq.s32.totalorder %v466, 17
          %vm723 = vcmp.eq.s32.totalorder %v467, 17
          %vm724 = vcmp.eq.s32.totalorder %v468, 17
          %vm725 = vcmp.eq.s32.totalorder %v469, 17
          %vm726 = vcmp.eq.s32.totalorder %v470, 17
          %vm727 = vcmp.eq.s32.totalorder %v471, 17
          %vm728 = vcmp.eq.s32.totalorder %v472, 17
          %vm729 = vcmp.eq.s32.totalorder %v473, 17
          %vm730 = vcmp.eq.s32.totalorder %v474, 17
          %vm731 = vcmp.eq.s32.totalorder %v475, 17
          %v733 = vperm.slane %v360, 0
          %v734 = vperm.slane %v360, 1
          %v737 = vsel %vm668, %v733, 0.0
          %v738 = vsel %vm669, %v734, 0.0
          %v739 = vsel %vm670, %v733, 0.0
          %v740 = vsel %vm671, %v734, 0.0
          %v741 = vsel %vm672, %v733, 0.0
          %v742 = vsel %vm673, %v734, 0.0
          %v743 = vsel %vm674, %v733, 0.0
          %v744 = vsel %vm675, %v734, 0.0
          %v745 = vsel %vm676, %v733, 0.0
          %v746 = vsel %vm677, %v734, 0.0
          %v747 = vsel %vm678, %v733, 0.0
          %v748 = vsel %vm679, %v734, 0.0
          %v749 = vsel %vm680, %v733, 0.0
          %v750 = vsel %vm681, %v734, 0.0
          %v751 = vsel %vm682, %v733, 0.0
          %v752 = vsel %vm683, %v734, 0.0
          %v753 = vsel %vm684, %v733, 0.0
          %v754 = vsel %vm685, %v734, 0.0
          %v755 = vsel %vm686, %v733, 0.0
          %v756 = vsel %vm687, %v734, 0.0
          %v757 = vsel %vm688, %v733, 0.0
          %v758 = vsel %vm689, %v734, 0.0
          %v759 = vsel %vm690, %v733, 0.0
          %v760 = vsel %vm691, %v734, 0.0
          %v761 = vsel %vm692, %v733, 0.0
          %v762 = vsel %vm693, %v734, 0.0
          %v763 = vsel %vm694, %v733, 0.0
          %v764 = vsel %vm695, %v734, 0.0
          %v765 = vsel %vm696, %v733, 0.0
          %v766 = vsel %vm697, %v734, 0.0
          %v767 = vsel %vm698, %v733, 0.0
          %v768 = vsel %vm699, %v734, 0.0
          %v769 = vsel %vm700, %v733, 0.0
          %v770 = vsel %vm701, %v734, 0.0
          %v771 = vsel %vm702, %v733, 0.0
          %v772 = vsel %vm703, %v734, 0.0
          %v773 = vsel %vm704, %v733, 0.0
          %v774 = vsel %vm705, %v734, 0.0
          %v775 = vsel %vm706, %v733, 0.0
          %v776 = vsel %vm707, %v734, 0.0
          %v777 = vsel %vm708, %v733, 0.0
          %v778 = vsel %vm709, %v734, 0.0
          %v779 = vsel %vm710, %v733, 0.0
          %v780 = vsel %vm711, %v734, 0.0
          %v781 = vsel %vm712, %v733, 0.0
          %v782 = vsel %vm713, %v734, 0.0
          %v783 = vsel %vm714, %v733, 0.0
          %v784 = vsel %vm715, %v734, 0.0
          %v785 = vsel %vm716, %v733, 0.0
          %v786 = vsel %vm717, %v734, 0.0
          %v787 = vsel %vm718, %v733, 0.0
          %v788 = vsel %vm719, %v734, 0.0
          %v789 = vsel %vm720, %v733, 0.0
          %v790 = vsel %vm721, %v734, 0.0
          %v791 = vsel %vm722, %v733, 0.0
          %v792 = vsel %vm723, %v734, 0.0
          %v793 = vsel %vm724, %v733, 0.0
          %v794 = vsel %vm725, %v734, 0.0
          %v795 = vsel %vm726, %v733, 0.0
          %v796 = vsel %vm727, %v734, 0.0
          %v797 = vsel %vm728, %v733, 0.0
          %v798 = vsel %vm729, %v734, 0.0
          %v799 = vsel %vm730, %v733, 0.0
          %v800 = vsel %vm731, %v734, 0.0
          %v802 = vperm.slane %v357, 0
          %v803 = vperm.slane %v357, 1
          %v806 = vsel %vm604, %v802, %v737
          %v807 = vsel %vm605, %v803, %v738
          %v808 = vsel %vm606, %v802, %v739
          %v809 = vsel %vm607, %v803, %v740
          %v810 = vsel %vm608, %v802, %v741
          %v811 = vsel %vm609, %v803, %v742
          %v812 = vsel %vm610, %v802, %v743
          %v813 = vsel %vm611, %v803, %v744
          %v814 = vsel %vm612, %v802, %v745
          %v815 = vsel %vm613, %v803, %v746
          %v816 = vsel %vm614, %v802, %v747
          %v817 = vsel %vm615, %v803, %v748
          %v818 = vsel %vm616, %v802, %v749
          %v819 = vsel %vm617, %v803, %v750
          %v820 = vsel %vm618, %v802, %v751
          %v821 = vsel %vm619, %v803, %v752
          %v822 = vsel %vm620, %v802, %v753
          %v823 = vsel %vm621, %v803, %v754
          %v824 = vsel %vm622, %v802, %v755
          %v825 = vsel %vm623, %v803, %v756
          %v826 = vsel %vm624, %v802, %v757
          %v827 = vsel %vm625, %v803, %v758
          %v828 = vsel %vm626, %v802, %v759
          %v829 = vsel %vm627, %v803, %v760
          %v830 = vsel %vm628, %v802, %v761
          %v831 = vsel %vm629, %v803, %v762
          %v832 = vsel %vm630, %v802, %v763
          %v833 = vsel %vm631, %v803, %v764
          %v834 = vsel %vm632, %v802, %v765
          %v835 = vsel %vm633, %v803, %v766
          %v836 = vsel %vm634, %v802, %v767
          %v837 = vsel %vm635, %v803, %v768
          %v838 = vsel %vm636, %v802, %v769
          %v839 = vsel %vm637, %v803, %v770
          %v840 = vsel %vm638, %v802, %v771
          %v841 = vsel %vm639, %v803, %v772
          %v842 = vsel %vm640, %v802, %v773
          %v843 = vsel %vm641, %v803, %v774
          %v844 = vsel %vm642, %v802, %v775
          %v845 = vsel %vm643, %v803, %v776
          %v846 = vsel %vm644, %v802, %v777
          %v847 = vsel %vm645, %v803, %v778
          %v848 = vsel %vm646, %v802, %v779
          %v849 = vsel %vm647, %v803, %v780
          %v850 = vsel %vm648, %v802, %v781
          %v851 = vsel %vm649, %v803, %v782
          %v852 = vsel %vm650, %v802, %v783
          %v853 = vsel %vm651, %v803, %v784
          %v854 = vsel %vm652, %v802, %v785
          %v855 = vsel %vm653, %v803, %v786
          %v856 = vsel %vm654, %v802, %v787
          %v857 = vsel %vm655, %v803, %v788
          %v858 = vsel %vm656, %v802, %v789
          %v859 = vsel %vm657, %v803, %v790
          %v860 = vsel %vm658, %v802, %v791
          %v861 = vsel %vm659, %v803, %v792
          %v862 = vsel %vm660, %v802, %v793
          %v863 = vsel %vm661, %v803, %v794
          %v864 = vsel %vm662, %v802, %v795
          %v865 = vsel %vm663, %v803, %v796
          %v866 = vsel %vm664, %v802, %v797
          %v867 = vsel %vm665, %v803, %v798
          %v868 = vsel %vm666, %v802, %v799
          %v869 = vsel %vm667, %v803, %v800
          %v871 = vperm.slane %v354, 0
          %v872 = vperm.slane %v354, 1
          %v875 = vsel %vm540, %v871, %v806
          %v876 = vsel %vm541, %v872, %v807
          %v877 = vsel %vm542, %v871, %v808
          %v878 = vsel %vm543, %v872, %v809
          %v879 = vsel %vm544, %v871, %v810
          %v880 = vsel %vm545, %v872, %v811
          %v881 = vsel %vm546, %v871, %v812
          %v882 = vsel %vm547, %v872, %v813
          %v883 = vsel %vm548, %v871, %v814
          %v884 = vsel %vm549, %v872, %v815
          %v885 = vsel %vm550, %v871, %v816
          %v886 = vsel %vm551, %v872, %v817
          %v887 = vsel %vm552, %v871, %v818
          %v888 = vsel %vm553, %v872, %v819
          %v889 = vsel %vm554, %v871, %v820
          %v890 = vsel %vm555, %v872, %v821
          %v891 = vsel %vm556, %v871, %v822
          %v892 = vsel %vm557, %v872, %v823
          %v893 = vsel %vm558, %v871, %v824
          %v894 = vsel %vm559, %v872, %v825
          %v895 = vsel %vm560, %v871, %v826
          %v896 = vsel %vm561, %v872, %v827
          %v897 = vsel %vm562, %v871, %v828
          %v898 = vsel %vm563, %v872, %v829
          %v899 = vsel %vm564, %v871, %v830
          %v900 = vsel %vm565, %v872, %v831
          %v901 = vsel %vm566, %v871, %v832
          %v902 = vsel %vm567, %v872, %v833
          %v903 = vsel %vm568, %v871, %v834
          %v904 = vsel %vm569, %v872, %v835
          %v905 = vsel %vm570, %v871, %v836
          %v906 = vsel %vm571, %v872, %v837
          %v907 = vsel %vm572, %v871, %v838
          %v908 = vsel %vm573, %v872, %v839
          %v909 = vsel %vm574, %v871, %v840
          %v910 = vsel %vm575, %v872, %v841
          %v911 = vsel %vm576, %v871, %v842
          %v912 = vsel %vm577, %v872, %v843
          %v913 = vsel %vm578, %v871, %v844
          %v914 = vsel %vm579, %v872, %v845
          %v915 = vsel %vm580, %v871, %v846
          %v916 = vsel %vm581, %v872, %v847
          %v917 = vsel %vm582, %v871, %v848
          %v918 = vsel %vm583, %v872, %v849
          %v919 = vsel %vm584, %v871, %v850
          %v920 = vsel %vm585, %v872, %v851
          %v921 = vsel %vm586, %v871, %v852
          %v922 = vsel %vm587, %v872, %v853
          %v923 = vsel %vm588, %v871, %v854
          %v924 = vsel %vm589, %v872, %v855
          %v925 = vsel %vm590, %v871, %v856
          %v926 = vsel %vm591, %v872, %v857
          %v927 = vsel %vm592, %v871, %v858
          %v928 = vsel %vm593, %v872, %v859
          %v929 = vsel %vm594, %v871, %v860
          %v930 = vsel %vm595, %v872, %v861
          %v931 = vsel %vm596, %v871, %v862
          %v932 = vsel %vm597, %v872, %v863
          %v933 = vsel %vm598, %v871, %v864
          %v934 = vsel %vm599, %v872, %v865
          %v935 = vsel %vm600, %v871, %v866
          %v936 = vsel %vm601, %v872, %v867
          %v937 = vsel %vm602, %v871, %v868
          %v938 = vsel %vm603, %v872, %v869
          %v940 = vperm.slane %v351, 0
          %v941 = vperm.slane %v351, 1
          %v944 = vsel %vm476, %v940, %v875
          %v945 = vsel %vm477, %v941, %v876
          %v946 = vsel %vm478, %v940, %v877
          %v947 = vsel %vm479, %v941, %v878
          %v948 = vsel %vm480, %v940, %v879
          %v949 = vsel %vm481, %v941, %v880
          %v950 = vsel %vm482, %v940, %v881
          %v951 = vsel %vm483, %v941, %v882
          %v952 = vsel %vm484, %v940, %v883
          %v953 = vsel %vm485, %v941, %v884
          %v954 = vsel %vm486, %v940, %v885
          %v955 = vsel %vm487, %v941, %v886
          %v956 = vsel %vm488, %v940, %v887
          %v957 = vsel %vm489, %v941, %v888
          %v958 = vsel %vm490, %v940, %v889
          %v959 = vsel %vm491, %v941, %v890
          %v960 = vsel %vm492, %v940, %v891
          %v961 = vsel %vm493, %v941, %v892
          %v962 = vsel %vm494, %v940, %v893
          %v963 = vsel %vm495, %v941, %v894
          %v964 = vsel %vm496, %v940, %v895
          %v965 = vsel %vm497, %v941, %v896
          %v966 = vsel %vm498, %v940, %v897
          %v967 = vsel %vm499, %v941, %v898
          %v968 = vsel %vm500, %v940, %v899
          %v969 = vsel %vm501, %v941, %v900
          %v970 = vsel %vm502, %v940, %v901
          %v971 = vsel %vm503, %v941, %v902
          %v972 = vsel %vm504, %v940, %v903
          %v973 = vsel %vm505, %v941, %v904
          %v974 = vsel %vm506, %v940, %v905
          %v975 = vsel %vm507, %v941, %v906
          %v976 = vsel %vm508, %v940, %v907
          %v977 = vsel %vm509, %v941, %v908
          %v978 = vsel %vm510, %v940, %v909
          %v979 = vsel %vm511, %v941, %v910
          %v980 = vsel %vm512, %v940, %v911
          %v981 = vsel %vm513, %v941, %v912
          %v982 = vsel %vm514, %v940, %v913
          %v983 = vsel %vm515, %v941, %v914
          %v984 = vsel %vm516, %v940, %v915
          %v985 = vsel %vm517, %v941, %v916
          %v986 = vsel %vm518, %v940, %v917
          %v987 = vsel %vm519, %v941, %v918
          %v988 = vsel %vm520, %v940, %v919
          %v989 = vsel %vm521, %v941, %v920
          %v990 = vsel %vm522, %v940, %v921
          %v991 = vsel %vm523, %v941, %v922
          %v992 = vsel %vm524, %v940, %v923
          %v993 = vsel %vm525, %v941, %v924
          %v994 = vsel %vm526, %v940, %v925
          %v995 = vsel %vm527, %v941, %v926
          %v996 = vsel %vm528, %v940, %v927
          %v997 = vsel %vm529, %v941, %v928
          %v998 = vsel %vm530, %v940, %v929
          %v999 = vsel %vm531, %v941, %v930
          %v1000 = vsel %vm532, %v940, %v931
          %v1001 = vsel %vm533, %v941, %v932
          %v1002 = vsel %vm534, %v940, %v933
          %v1003 = vsel %vm535, %v941, %v934
          %v1004 = vsel %vm536, %v940, %v935
          %v1005 = vsel %vm537, %v941, %v936
          %v1006 = vsel %vm538, %v940, %v937
          %v1007 = vsel %vm539, %v941, %v938
          %s1008 = smul.u32 %s367, 2
          %s1009 = smul.addr %s1008, 4
          %s1010 = scalar_lea.vmem %s253, %s1009 [#allocation10]
          %v1011 = vld [vmem:[%s1010] sm:$0xff]
          %1013 = vst [vmem:[#allocation1] ss:$2 sm:$0xff] %v1011
          %v1014 = vld.sshfl [vmem:[#allocation1] sm:$0xff pattern:$0x75316420]
          %v1015 = vld.sshfl [vmem:[#allocation1 + $0x8] sm:$0xff pattern:$0x75316420]
          %1018 = vmatpush.msra.mxu0 %v974
          %1019 = vmatpush.msra.mxu0 %v972
          %1020 = vmatpush.msra.mxu0 %v970
          %1021 = vmatpush.msra.mxu0 %v968
          %1022 = vmatpush.msra.mxu0 %v966
          %1023 = vmatpush.msra.mxu0 %v964
          %1024 = vmatpush.msra.mxu0 %v962
          %1025 = vmatpush.msra.mxu0 %v960
          %1026 = vmatpush.msra.mxu0 %v958
          %1027 = vmatpush.msra.mxu0 %v956
          %1028 = vmatpush.msra.mxu0 %v954
          %1029 = vmatpush.msra.mxu0 %v952
          %1030 = vmatpush.msra.mxu0 %v950
          %1031 = vmatpush.msra.mxu0 %v948
          %1032 = vmatpush.msra.mxu0 %v946
          %1033 = vmatpush.msra.mxu0 %v944
          %1034 = vmatmul.f32.gmra.mxu0 %v1014
          %v1035 = vpop.f32.mrf.mxu0
          %v1036 = vadd.f32 0.0, %v1035
          %1037 = vdwg.mxu0
          %1038 = vmatpush.msra.mxu0 %v1006
          %1039 = vmatpush.msra.mxu0 %v1004
          %1040 = vmatpush.msra.mxu0 %v1002
          %1041 = vmatpush.msra.mxu0 %v1000
          %1042 = vmatpush.msra.mxu0 %v998
          %1043 = vmatpush.msra.mxu0 %v996
          %1044 = vmatpush.msra.mxu0 %v994
          %1045 = vmatpush.msra.mxu0 %v992
          %1046 = vmatpush.msra.mxu0 %v990
          %1047 = vmatpush.msra.mxu0 %v988
          %1048 = vmatpush.msra.mxu0 %v986
          %1049 = vmatpush.msra.mxu0 %v984
          %1050 = vmatpush.msra.mxu0 %v982
          %1051 = vmatpush.msra.mxu0 %v980
          %1052 = vmatpush.msra.mxu0 %v978
          %1053 = vmatpush.msra.mxu0 %v976
          %1054 = vmatmul.f32.gmra.mxu0 %v1015
          %v1055 = vpop.f32.mrf.mxu0
          %v1056 = vadd.f32 %v1036, %v1055
          %1057 = vdwg.mxu0
          %1058 = vmatpush.msra.mxu0 %v975
          %1059 = vmatpush.msra.mxu0 %v973
          %1060 = vmatpush.msra.mxu0 %v971
          %1061 = vmatpush.msra.mxu0 %v969
          %1062 = vmatpush.msra.mxu0 %v967
          %1063 = vmatpush.msra.mxu0 %v965
          %1064 = vmatpush.msra.mxu0 %v963
          %1065 = vmatpush.msra.mxu0 %v961
          %1066 = vmatpush.msra.mxu0 %v959
          %1067 = vmatpush.msra.mxu0 %v957
          %1068 = vmatpush.msra.mxu0 %v955
          %1069 = vmatpush.msra.mxu0 %v953
          %1070 = vmatpush.msra.mxu0 %v951
          %1071 = vmatpush.msra.mxu0 %v949
          %1072 = vmatpush.msra.mxu0 %v947
          %1073 = vmatpush.msra.mxu0 %v945
          %1074 = vmatmul.f32.gmra.mxu0 %v1014
          %v1075 = vpop.f32.mrf.mxu0
          %v1076 = vadd.f32 0.0, %v1075
          %1077 = vdwg.mxu0
          %1078 = vmatpush.msra.mxu0 %v1007
          %1079 = vmatpush.msra.mxu0 %v1005
          %1080 = vmatpush.msra.mxu0 %v1003
          %1081 = vmatpush.msra.mxu0 %v1001
          %1082 = vmatpush.msra.mxu0 %v999
          %1083 = vmatpush.msra.mxu0 %v997
          %1084 = vmatpush.msra.mxu0 %v995
          %1085 = vmatpush.msra.mxu0 %v993
          %1086 = vmatpush.msra.mxu0 %v991
          %1087 = vmatpush.msra.mxu0 %v989
          %1088 = vmatpush.msra.mxu0 %v987
          %1089 = vmatpush.msra.mxu0 %v985
          %1090 = vmatpush.msra.mxu0 %v983
          %1091 = vmatpush.msra.mxu0 %v981
          %1092 = vmatpush.msra.mxu0 %v979
          %1093 = vmatpush.msra.mxu0 %v977
          %1094 = vmatmul.f32.gmra.mxu0 %v1015
          %v1095 = vpop.f32.mrf.mxu0
          %v1096 = vadd.f32 %v1076, %v1095
          %1097 = vdwg.mxu0
          %v1098 = vadd.f32 %v372, %v1056
          %v1099 = vadd.f32 %v373, %v1096
        $region49: #{tpu_custom_call.1} parent=31 // loop_footer
          %s369 = sadd.s32 %s367, 1
        $region50: #{tpu_custom_call.1} parent=31 // loop_footer_branch
          %366 = sbr.rel target = $region46
        $region51: #{tpu_custom_call.1} parent=31 // loop_exit
          _
        %v1102 = vrot.slane %v373, 4
        %vm1103 = vcmask 1043456
        %v1104 = vsel %vm1103, %v372, %v1102
        %1106 = vst [vmem:[%s281] sm:$0xff] %v1104
        %s1107 = sand.u32 %s138, 1
        %s1108 = scalar_lea.sflag [#allocation7], %s1107
        %s1109 = sand.u32 %s138, 1
        %s1110 = smul.addr %s1109, 8
        %s1111 = scalar_lea.vmem [#allocation11], %s1110
        // Predicated region
        $region52: #{tpu_custom_call.1} parent=31 // pred_check
          %p1112 = pneg %p148
        $region53: #{tpu_custom_call.1} parent=31 // pred_check_branch
          %1114 = sbr.rel (%p1112) target = $region55
        $region54: #{tpu_custom_call.1} parent=31 // pred_region
          %s1115 = smul.u32 2, %s41
          %1117 = vsyncadd %s1108, 0
          %s1118 = smul.addr %s40, 2
          %s1119 = sadd.s32 %s1115, %s1118
          %s1120 = smul.addr %s1119, 4
          %s1121 = scalar_lea.hbm %s5, %s1120
          %s1123 = sshll.u32 %s1111, 4
          %s1124 = int_to_ptr.vmem [resolvable:$true] %s1123
          %s1125 = sshll.u32 %s1121, 4
          %s1126 = int_to_ptr.hbm [resolvable:$true] %s1125
          %1128 = dma.vmem_to_hbm [thread:$0]  %s1124, 128, %s1126, %s1108
        $region55: #{tpu_custom_call.1} parent=31 // pred_fallthru
          _
      $region32: #{tpu_custom_call.1} parent=5 // pred_fallthru
        _
      %p1129 = scmp.le.s32.totalorder 2, %s31
      // Predicated region
      $region56: #{tpu_custom_call.1} parent=5 // pred_check
        %p1130 = pneg %p1129
      $region57: #{tpu_custom_call.1} parent=5 // pred_check_branch
        %1132 = sbr.rel (%p1130) target = $region59
      $region58: #{tpu_custom_call.1} parent=5 // pred_region
        %s1133 = ssub.s32 %s31, 2
        // Predicated region
        $region60: #{tpu_custom_call.1} parent=58 // pred_check
          %p1134 = pneg %p154
        $region61: #{tpu_custom_call.1} parent=58 // pred_check_branch
          %1136 = sbr.rel (%p1134) target = $region63
        $region62: #{tpu_custom_call.1} parent=58 // pred_region
          %s1137 = sand.u32 %s139, 1
          %s1138 = scalar_lea.sflag [#allocation7], %s1137
          %s1139 = sand.u32 %s139, 1
          %s1140 = smul.addr %s1139, 8
          %s1141 = scalar_lea.vmem [#allocation11], %s1140
          %1143 = dma.done %s1138, 128
        $region63: #{tpu_custom_call.1} parent=58 // pred_fallthru
          _
      $region59: #{tpu_custom_call.1} parent=5 // pred_fallthru
        _
    $region6: #{tpu_custom_call.1} parent=1 // loop_footer
      %s35 = sadd.s32 1, %s31
    $region7: #{tpu_custom_call.1} parent=1 // loop_footer_branch
      %30 = sbr.rel target = $region3
    $region8: #{tpu_custom_call.1} parent=1 // loop_exit
      _
    %1144 = vsyncpa [#allocation6], 1
    %s1145 = scalar_lea.sflag [#allocation6], 1
    %1146 = vsyncpa %s1145, 1
    %1147 = vsyncpa [#allocation9], 1
    %s1148 = scalar_lea.sflag [#allocation9], 1
    %1149 = vsyncpa %s1148, 1
    %1150 = vsyncpa [#allocation7], 1
    %s1151 = scalar_lea.sflag [#allocation7], 1
    %1152 = vsyncpa %s1151, 1

</llo_original>
